<compile_context>
chip_gen: v7x
topology: tpu7x:2x2x1
jax: 0.10.0
libtpu: 0.0.40
codegen_flags: <defaults>
</compile_context>

<pallas_src>
import functools
import math

import jax
import jax.numpy as jnp
from jax.experimental import pallas as pl
from jax.experimental.pallas import tpu as pltpu


# ----------------------------- budgets & small utils -----------------------------

@functools.lru_cache(maxsize=1)
def _vmem_budgets():
    """(tile_budget_bytes, vmem_limit_bytes), generation-aware.

    tile_budget already accounts for in+out tiles, double-buffered (factor 4
    applied by the callers), so budget ~= VMEM/4 and limit ~= VMEM/2:
      v5e/v6e (128 MiB): budget 32 MiB, limit 64 MiB
      v7x     ( 64 MiB): budget 16 MiB, limit 32 MiB
    """
    vmem = None
    try:
        info = pltpu.get_tpu_info()
        vmem = getattr(info, "vmem_capacity_bytes", None)
    except Exception:
        vmem = None
    if not vmem:
        return 8 * 1024 * 1024, 32 * 1024 * 1024      # safe on every generation
    limit = min(vmem // 2, 64 * 1024 * 1024)
    budget = min(max(vmem // 4, 4 * 1024 * 1024), limit)
    return budget, limit


def _sublane_align(dtype):
    # f32 -> 8, bf16/f16 -> 16, int8/fp8 -> 32 (sublane packing factors).
    return {4: 8, 2: 16, 1: 32}.get(jnp.dtype(dtype).itemsize, 8)


def _cost(x):
    nbytes = x.size * jnp.dtype(x.dtype).itemsize
    # Pure data movement: read everything once, write everything once.
    return pl.CostEstimate(flops=0, transcendentals=0, bytes_accessed=2 * nbytes)


# --------------------- fast path: NCHW -> NHWC (perm == (0, 2, 3, 1)) ---------------------

def _fast_path_tiles(shape, dtype, budget):
    """Pick (tH, tW). tH need not divide H (pl.cdiv grid, ragged last block)."""
    N, C, H, W = shape
    itemsize = jnp.dtype(dtype).itemsize
    align = _sublane_align(dtype)
    row_bytes = 4 * C * W * itemsize           # one h-row: in+out tiles, double-buffered
    max_h = budget // max(row_bytes, 1)
    if max_h >= H:
        return H, W
    if max_h >= align:
        return (max_h // align) * align, W     # largest sublane-aligned height that fits
    # Even `align` rows of the full width overflow the budget: tile W too
    # (lane-aligned so blocks stay (8,128)-legal and the collapsed output block
    # stays rectangular in (w, c)).
    tH = min(align, H)
    col_bytes = 4 * C * tH * itemsize
    max_w = budget // max(col_bytes, 1)
    tW = (max_w // 128) * 128
    if tW <= 0:
        # TODO(synk): also split C when a single (align x 128) slab of all
        # channels overflows the budget (C of several thousand).
        tW = min(W, 128)
    return tH, min(tW, W)


def _nchw_call(x, *, variant, tH, tW, limit):
    """One NCHW->NHWC pallas_call. Returns the result already in (N, H, W, C)."""
    N, C, H, W = x.shape
    grid = (N, pl.cdiv(H, tH), pl.cdiv(W, tW))
    in_spec = pl.BlockSpec((1, C, tH, tW), lambda n, h, w: (n, 0, h, w))
    cparams = pltpu.CompilerParams(
        dimension_semantics=("parallel", "parallel", "parallel"),
        vmem_limit_bytes=limit)
    cost = _cost(x)

    if variant == "lane_dense":
        # TODO(synk): when W*C < 128 the lane-dense store is still a masked
        # vst.msk; collapsing H into the lane dim would widen it but needs a
        # sublane-legal 2-D output block.
        def kernel(x_ref, o_ref):
            y = jnp.transpose(x_ref[...], (0, 2, 3, 1))        # (1, tH, tW, C)
            o_ref[...] = y.reshape(1, tH, tW * C)

        out = pl.pallas_call(
            kernel,
            out_shape=jax.ShapeDtypeStruct((N, H, W * C), x.dtype),
            grid_spec=pltpu.PrefetchScalarGridSpec(
                num_scalar_prefetch=0, grid=grid,
                in_specs=[in_spec],
                out_specs=pl.BlockSpec((1, tH, tW * C), lambda n, h, w: (n, h, w))),
            compiler_params=cparams, cost_estimate=cost,
        )(x)
        return out.reshape(N, H, W, C)       # free, contiguous reshape outside the kernel

    # "plain": no minor-dim merge (fallback if the lane-dense relayout is rejected).
    def kernel(x_ref, o_ref):
        o_ref[...] = jnp.transpose(x_ref[...], (0, 2, 3, 1))

    return pl.pallas_call(
        kernel,
        out_shape=jax.ShapeDtypeStruct((N, H, W, C), x.dtype),
        grid_spec=pltpu.PrefetchScalarGridSpec(
            num_scalar_prefetch=0, grid=grid,
            in_specs=[in_spec],
            out_specs=pl.BlockSpec((1, tH, tW, C), lambda n, h, w: (n, h, w, 0))),
        compiler_params=cparams, cost_estimate=cost,
    )(x)


@functools.lru_cache(maxsize=None)
def _fast_variant(shape, dtype_name, tH, tW, limit):
    """Probe the lane-dense lowering ONCE per (shape, dtype, tiles) via AOT compile."""
    spec = jax.ShapeDtypeStruct(shape, jnp.dtype(dtype_name))
    fn = functools.partial(_nchw_call, variant="lane_dense", tH=tH, tW=tW, limit=limit)
    try:
        jax.jit(fn).lower(spec).compile()
        return "lane_dense"
    except Exception:
        return "plain"


def _nchw_to_nhwc(x, budget, limit):
    tH, tW = _fast_path_tiles(x.shape, x.dtype, budget)
    variant = _fast_variant(tuple(x.shape), str(x.dtype), tH, tW, limit)
    return _nchw_call(x, variant=variant, tH=tH, tW=tW, limit=limit)


# ----------------------- tiled minor-axis swap (2-D transpose & friends) -----------------------

def _minor_swap(x, budget, limit):
    """perm = identity on leading dims, last two axes swapped. Tiled + pipelined."""
    shape = x.shape
    lead = shape[:-2]
    R, Cc = shape[-2], shape[-1]
    itemsize = jnp.dtype(x.dtype).itemsize

    cs = 512                               # 128-aligned square-ish tiles
    while cs > 128 and 4 * itemsize * min(R, cs) * min(Cc, cs) > budget:
        cs //= 2
    tR = R if R <= cs else cs              # full extent or a multiple of 128 -> (8,128)-legal
    tC = Cc if Cc <= cs else cs            # on both the input and transposed output blocks

    nlead = len(lead)
    grid = tuple(lead) + (pl.cdiv(R, tR), pl.cdiv(Cc, tC))
    in_block = (1,) * nlead + (tR, tC)
    out_block = (1,) * nlead + (tC, tR)

    def in_map(*g):
        return g

    def out_map(*g):
        return g[:nlead] + (g[nlead + 1], g[nlead])

    def kernel(x_ref, o_ref):
        o_ref[...] = jnp.swapaxes(x_ref[...], -1, -2)

    return pl.pallas_call(
        kernel,
        out_shape=jax.ShapeDtypeStruct(tuple(lead) + (Cc, R), x.dtype),
        grid_spec=pltpu.PrefetchScalarGridSpec(
            num_scalar_prefetch=0, grid=grid,
            in_specs=[pl.BlockSpec(in_block, in_map)],
            out_specs=pl.BlockSpec(out_block, out_map)),
        compiler_params=pltpu.CompilerParams(
            dimension_semantics=("parallel",) * len(grid),
            vmem_limit_bytes=limit),
        cost_estimate=_cost(x),
    )(x)


# ------------------------------- general permutation path -------------------------------

def _general_permute(x, perm, budget, limit):
    ndim = x.ndim
    shape = x.shape
    out_shape = tuple(shape[p] for p in perm)
    itemsize = jnp.dtype(x.dtype).itemsize

    minor_in = {ndim - 1, ndim - 2} if ndim >= 2 else {ndim - 1}
    minor_out = {perm[-1], perm[-2]} if ndim >= 2 else {perm[-1]}
    # Input axes tileable without touching either layout's minor dims, ordered
    # so the output's leading axes are tiled first (keeps output writes contiguous).
    tileable = [d for d in perm if d not in minor_in and d not in minor_out]

    tiles = {d: shape[d] for d in range(ndim)}
    for d in tileable:
        blk = 4 * itemsize * math.prod(tiles.values())   # in+out, double-buffered
        if blk <= budget:
            break
        per_unit = max(blk // max(tiles[d], 1), 1)
        tiles[d] = max(1, min(shape[d], budget // per_unit))
    # TODO(synk): if the minor dims alone still overflow the budget, a fully
    # general (8,128)-tiled transpose of both minor axes is needed here.

    grid_dims = tileable
    grid = tuple(pl.cdiv(shape[d], tiles[d]) for d in grid_dims) or (1,)
    pos = {d: i for i, d in enumerate(grid_dims)}
    in_block = tuple(tiles[d] for d in range(ndim))
    out_block = tuple(tiles[p] for p in perm)

    def in_map(*g):
        return tuple(g[pos[d]] if d in pos else 0 for d in range(ndim))

    def out_map(*g):
        return tuple(g[pos[p]] if p in pos else 0 for p in perm)

    def kernel(x_ref, o_ref):
        o_ref[...] = jnp.transpose(x_ref[...], perm)

    return pl.pallas_call(
        kernel,
        out_shape=jax.ShapeDtypeStruct(out_shape, x.dtype),
        grid_spec=pltpu.PrefetchScalarGridSpec(
            num_scalar_prefetch=0, grid=grid,
            in_specs=[pl.BlockSpec(in_block, in_map)],
            out_specs=pl.BlockSpec(out_block, out_map)),
        compiler_params=pltpu.CompilerParams(
            dimension_semantics=("parallel",) * len(grid),
            vmem_limit_bytes=limit),
        cost_estimate=_cost(x),
    )(x)


# ------------------------------------- public entry -------------------------------------

def pallas_permute(x, perm):
    """Pallas TPU equivalent of torch.permute(x, perm)."""
    perm = tuple(int(p) for p in perm)
    assert sorted(perm) == list(range(x.ndim)), "perm must be a permutation"
    if perm == tuple(range(x.ndim)):
        return x                                     # identity permute is a no-op view

    budget, limit = _vmem_budgets()
    if x.ndim == 4 and perm == (0, 2, 3, 1):
        return _nchw_to_nhwc(x, budget, limit)
    if (x.ndim >= 2
            and perm[:-2] == tuple(range(x.ndim - 2))
            and perm[-2:] == (x.ndim - 1, x.ndim - 2)):
        return _minor_swap(x, budget, limit)
    return _general_permute(x, perm, budget, limit)


if __name__ == "__main__":
    key = jax.random.PRNGKey(0)
    x = jax.random.normal(key, (2, 4, 16, 16), dtype=jnp.float32)   # NCHW

    # Primary case from the ONNX graph: NCHW -> NHWC (fast path).
    perm = (0, 2, 3, 1)
    out = jax.block_until_ready(pallas_permute(x, perm))
    ref = jnp.transpose(x, perm)
    assert out.shape == ref.shape and out.dtype == ref.dtype
    assert jnp.array_equal(out, ref), "NCHW->NHWC permute mismatch"

    # General tiled path (leading-axis permutation).
    perm2 = (1, 0, 2, 3)
    out2 = jax.block_until_ready(pallas_permute(x, perm2))
    ref2 = jnp.transpose(x, perm2)
    assert out2.shape == ref2.shape and out2.dtype == ref2.dtype
    assert jnp.array_equal(out2, ref2), "general permute mismatch"

    # Tiled minor-axis swap path (inner transpose).
    perm3 = (0, 1, 3, 2)
    out3 = jax.block_until_ready(pallas_permute(x, perm3))
    ref3 = jnp.transpose(x, perm3)
    assert out3.shape == ref3.shape and out3.dtype == ref3.dtype
    assert jnp.array_equal(out3, ref3), "minor-swap permute mismatch"

    print("KERNEL_OK")
</pallas_src>

<mosaic_0001>
module attributes {stable_mosaic.version = 11 : i64} {
  func.func @kernel(%arg0: i32, %arg1: i32, %arg2: i32, %arg3: memref<1x4x16x16xf32, #tpu.memory_space<vmem>>, %arg4: memref<1x16x16x4xf32, #tpu.memory_space<vmem>>) attributes {dimension_semantics = [#tpu.dimension_semantics<parallel>, #tpu.dimension_semantics<parallel>, #tpu.dimension_semantics<parallel>], iteration_bounds = array<i64: 2, 1, 1>, scalar_prefetch = 0 : i64, scratch_operands = 0 : i64, tpu.core_type = #tpu.core_type<tc>, window_params = [{transform_indices = @transform_0, window_bounds = array<i64: 1, 4, 16, 16>}, {transform_indices = @transform_1, window_bounds = array<i64: 1, 16, 16, 4>}]} {
    %c0 = arith.constant 0 : index
    %c0_0 = arith.constant 0 : index
    %c0_1 = arith.constant 0 : index
    %c0_2 = arith.constant 0 : index
    %0 = vector.load %arg3[%c0, %c0_0, %c0_1, %c0_2] : memref<1x4x16x16xf32, #tpu.memory_space<vmem>>, vector<1x4x16x16xf32>
    %1 = tpu.transpose %0, [0, 2, 3, 1] : vector<1x4x16x16xf32> -> vector<1x16x16x4xf32>
    %c0_3 = arith.constant 0 : index
    %c0_4 = arith.constant 0 : index
    %c0_5 = arith.constant 0 : index
    %c0_6 = arith.constant 0 : index
    %2 = vector.load %arg4[%c0_3, %c0_4, %c0_5, %c0_6] : memref<1x16x16x4xf32, #tpu.memory_space<vmem>>, vector<1x16x16x4xf32>
    tpu.vector_store %arg4[%c0_3, %c0_4, %c0_5, %c0_6], %1 {strides = array<i32>} : memref<1x16x16x4xf32, #tpu.memory_space<vmem>>, vector<1x16x16x4xf32>,
    return
  }
  func.func @transform_0(%arg0: i32, %arg1: i32, %arg2: i32) -> (i32, i32, i32, i32) {
    %c0_i32 = arith.constant 0 : i32
    %c0_i32_0 = arith.constant 0 : i32
    return %arg0, %c0_i32, %arg1, %arg2 : i32, i32, i32, i32
  }
  func.func @transform_1(%arg0: i32, %arg1: i32, %arg2: i32) -> (i32, i32, i32, i32) {
    %c0_i32 = arith.constant 0 : i32
    %c0_i32_0 = arith.constant 0 : i32
    return %arg0, %arg1, %arg2, %c0_i32 : i32, i32, i32, i32
  }
}

</mosaic_0001>

<llo_original>
// kernel: tpu_custom_call.1
$region0: #{tpu_custom_call.1}
  #allocation0 [shape = 'u32[]', space=smem, size = 0x4, offset = 0x4, fixed_abs, tag = 'smem constant byte address 0x4 - core index']
  #allocation1 [shape = 'u32[144,128]{1,0:T(1,128)}', space=vmem, size = 0x12000, scoped, tag = 'internal scratch']
  %s0 = inlined_call_operand.hbm [shape: f32[2,4,16,16], index: 0, kind: input, shape index: {}]
  %s1 = inlined_call_operand.vmem [shape: f32[2,16,16,4], index: 1, kind: output, shape index: {}]
  %s2 = sld [smem:[#allocation0]]
  $region41: #{tpu_custom_call.1} parent=0
    _
  %s4 = ssub.s32 1, %s2
  %s5 = scalar_select 0, %s4, %s2
  $region1: #{tpu_custom_call.1} parent=0
    #allocation2 [shape = 'u8[65536]{0}', space=vmem, size = 0x10000, scoped, tag = 'input window, operand 0']
    #allocation3 [shape = 's32[2]{0}', space=sflag, size = 0x8, scoped, tag = 'scoped memory for tpu_custom_call.1']
    %6 = vsyncpa [#allocation3], 0
    %s7 = scalar_lea.sflag [#allocation3], 1
    %8 = vsyncpa %s7, 0
    loop: start=0, step=1, limit=4
    $region2: #{tpu_custom_call.1} parent=1 // loop_pre_header
      _
    $region3: #{tpu_custom_call.1} parent=1 // loop_header
      %s10 = sphi 0, %s14
      %p11 = scmp.ge.s32.totalorder %s10, 4
      %s17 = sphi 0, %s36
      %s18 = sphi 0, %s32
      %s19 = sphi 0, %s28
      %s20 = sphi 0, %s17
      %s21 = sphi 0, %s18
      %s22 = sphi 0, %s19
      %s23 = sphi 0, %s20
      %s24 = sphi 0, %s21
      %s25 = sphi 0, %s22
      %s43 = sphi 0, %s45
      %s46 = sphi 0, %s43
      %s47 = sphi 0, %s46
      %s63 = sphi 0, %s47
      %s73 = sphi 0, %s75
      %s76 = sphi 0, %s73
      %s77 = sphi 0, %s76
      %s93 = sphi 0, %s77
    $region4: #{tpu_custom_call.1} parent=1 // loop_header_branch
      %13 = sbr.rel (%p11) target = $region8
    $region5: #{tpu_custom_call.1} parent=1 // loop_body
      %s15 = ssub.s32 %s10, 1
      %s16 = ssub.s32 %s10, 2
      %s26 = sadd.s32 1, %s19
      %p27 = scmp.ge.s32.totalorder %s26, 1
      %s28 = scalar_select %p27, 0, %s26
      %s29 = sadd.s32 1, %s18
      %s30 = scalar_select %p27, %s29, %s18
      %p31 = scmp.ge.s32.totalorder %s30, 1
      %s32 = scalar_select %p31, 0, %s30
      %s33 = sadd.s32 1, %s17
      %s34 = scalar_select %p31, %s33, %s17
      %p35 = scmp.ge.s32.totalorder %s34, 2
      %s36 = scalar_select %p35, 0, %s34
      %s37 = ssub.s32 %s17, %s36
      %s38 = ssub.s32 %s18, %s32
      %s39 = sor.u32 %s37, %s38
      %s40 = ssub.s32 %s19, %s28
      %s41 = sor.u32 %s39, %s40
      %p42 = scmp.eq.s32.totalorder %s41, 0
      %s44 = sadd.s32 %s43, 1
      %s45 = scalar_select %p42, %s43, %s44
      %p48 = pneg %p42
      %p49 = scmp.eq.s32.totalorder %s10, 1
      %p50 = por %p48, %p49
      %p51 = scmp.ne.s32.totalorder %s43, %s46
      %p52 = scmp.eq.s32.totalorder %s10, 0
      %p53 = por %p51, %p52
      %p54 = scmp.ne.s32.totalorder %s43, %s46
      %p55 = scmp.eq.s32.totalorder %s15, 1
      %p56 = por %p54, %p55
      %p57 = scmp.ne.s32.totalorder %s46, %s47
      %p58 = scmp.eq.s32.totalorder %s15, 0
      %p59 = por %p57, %p58
      %p60 = scmp.ne.s32.totalorder %s46, %s47
      %p61 = scmp.eq.s32.totalorder %s16, 1
      %p62 = por %p60, %p61
      %p64 = scmp.ne.s32.totalorder %s47, %s63
      %p65 = scmp.eq.s32.totalorder %s16, 0
      %p66 = por %p64, %p65
      %s67 = ssub.s32 %s17, %s36
      %s68 = ssub.s32 %s18, %s32
      %s69 = sor.u32 %s67, %s68
      %s70 = ssub.s32 %s19, %s28
      %s71 = sor.u32 %s69, %s70
      %p72 = scmp.eq.s32.totalorder %s71, 0
      %s74 = sadd.s32 %s73, 1
      %s75 = scalar_select %p72, %s73, %s74
      %p78 = pneg %p72
      %p79 = scmp.eq.s32.totalorder %s10, 1
      %p80 = por %p78, %p79
      %p81 = scmp.ne.s32.totalorder %s73, %s76
      %p82 = scmp.eq.s32.totalorder %s10, 0
      %p83 = por %p81, %p82
      %p84 = scmp.ne.s32.totalorder %s73, %s76
      %p85 = scmp.eq.s32.totalorder %s15, 1
      %p86 = por %p84, %p85
      %p87 = scmp.ne.s32.totalorder %s76, %s77
      %p88 = scmp.eq.s32.totalorder %s15, 0
      %p89 = por %p87, %p88
      %p90 = scmp.ne.s32.totalorder %s76, %s77
      %p91 = scmp.eq.s32.totalorder %s16, 1
      %p92 = por %p90, %p91
      %p94 = scmp.ne.s32.totalorder %s77, %s93
      %p95 = scmp.eq.s32.totalorder %s16, 0
      %p96 = por %p94, %p95
      %p97 = scmp.le.s32.totalorder 1, %s10
      %p98 = scmp.lt.s32.totalorder %s10, 3
      %p99 = pnand %p97, %p98
      %p100 = pneg %p99
      // Predicated region
      $region9: #{tpu_custom_call.1} parent=5 // pred_check
        _
      $region10: #{tpu_custom_call.1} parent=5 // pred_check_branch
        %102 = sbr.rel (%p99) target = $region12
      $region11: #{tpu_custom_call.1} parent=5 // pred_region
        %s103 = ssub.s32 %s10, 1
      $region12: #{tpu_custom_call.1} parent=5 // pred_fallthru
        _
      %p104 = scmp.lt.s32.totalorder %s10, 2
      // Predicated region
      $region13: #{tpu_custom_call.1} parent=5 // pred_check
        %p105 = pneg %p104
      $region14: #{tpu_custom_call.1} parent=5 // pred_check_branch
        %107 = sbr.rel (%p105) target = $region16
      $region15: #{tpu_custom_call.1} parent=5 // pred_region
        // Predicated region
        $region17: #{tpu_custom_call.1} parent=15 // pred_check
          %p108 = pneg %p53
        $region18: #{tpu_custom_call.1} parent=15 // pred_check_branch
          %110 = sbr.rel (%p108) target = $region20
        $region19: #{tpu_custom_call.1} parent=15 // pred_region
          %s111 = sand.u32 %s43, 1
          %s112 = scalar_lea.sflag [#allocation3], %s111
          %s113 = sand.u32 %s43, 1
          %s114 = smul.addr %s113, 64
          %s115 = scalar_lea.vmem [#allocation2], %s114
          %s116 = smul.u32 2, %s18
          %s118 = ssub.s32 1024, 1024
          %119 = vsyncadd %s112, %s118
          %s120 = sadd.s32 %s19, %s116
          %s121 = smul.addr %s17, 8
          %s122 = sadd.s32 %s120, %s121
          %s123 = smul.addr %s122, 128
          %s124 = scalar_lea.hbm %s0, %s123
          %s125 = sshll.u32 %s115, 4
          %s126 = int_to_ptr.vmem [resolvable:$true] %s125
          %131 = dma.hbm_to_vmem [thread:$0]  %s124, 1024, %s126, %s112, 128, 128, 8
        $region20: #{tpu_custom_call.1} parent=15 // pred_fallthru
          _
      $region16: #{tpu_custom_call.1} parent=5 // pred_fallthru
        _
      %p132 = scmp.le.s32.totalorder 1, %s10
      %p133 = scmp.lt.s32.totalorder %s10, 3
      %p134 = pnand %p132, %p133
      %p135 = pneg %p134
      // Predicated region
      $region21: #{tpu_custom_call.1} parent=5 // pred_check
        _
      $region22: #{tpu_custom_call.1} parent=5 // pred_check_branch
        %137 = sbr.rel (%p134) target = $region24
      $region23: #{tpu_custom_call.1} parent=5 // pred_region
        %s138 = ssub.s32 %s10, 1
        %s139 = sand.u32 %s46, 1
        %s140 = scalar_lea.sflag [#allocation3], %s139
        %s141 = sand.u32 %s46, 1
        %s142 = smul.addr %s141, 64
        %s143 = scalar_lea.vmem [#allocation2], %s142
        // Predicated region
        $region25: #{tpu_custom_call.1} parent=23 // pred_check
          %p144 = pneg %p59
        $region26: #{tpu_custom_call.1} parent=23 // pred_check_branch
          %146 = sbr.rel (%p144) target = $region28
        $region27: #{tpu_custom_call.1} parent=23 // pred_region
          %147 = dma.done %s140, 1024
        $region28: #{tpu_custom_call.1} parent=23 // pred_fallthru
          _
        %s148 = sand.u32 %s46, 1
        %s149 = scalar_lea.sflag [#allocation3], %s148
        %s150 = sand.u32 %s46, 1
        %s151 = smul.addr %s150, 64
        %s152 = scalar_lea.vmem [#allocation2], %s151
        %p153 = pneg %p59
        %p154 = pneg %p56
        %p155 = pneg %p89
        %p156 = pneg %p86
        %s157 = smul.u32 16, %s21
        %s158 = smul.u32 2, %s22
        %p159 = scmp.lt.s32.totalorder %s20, 1
        %s160 = scalar_select %p159, %s20, 1
        %p161 = scmp.lt.s32.totalorder %s157, 15
        %s162 = scalar_select %p161, %s157, 15
        %p163 = scmp.lt.s32.totalorder %s158, 1
        %s164 = scalar_select %p163, %s158, 1
        %s165 = smul.addr %s162, 2
        %s166 = sadd.s32 %s164, %s165
        %s167 = smul.addr %s160, 32
        %s168 = sadd.s32 %s166, %s167
        %s169 = smul.addr %s168, 8
        %s170 = scalar_lea.vmem %s1, %s169
        %s171 = smul.u32 2, %s21
        %s172 = smul.u32 16, %s21
        %s173 = smul.u32 2, %s22
        %p174 = scmp.lt.s32.totalorder %s20, 1
        %s175 = scalar_select %p174, %s20, 1
        %p176 = scmp.lt.s32.totalorder %s172, 15
        %s177 = scalar_select %p176, %s172, 15
        %p178 = scmp.lt.s32.totalorder %s173, 1
        %s179 = scalar_select %p178, %s173, 1
        %s180 = smul.addr %s177, 2
        %s181 = sadd.s32 %s179, %s180
        %s182 = smul.addr %s175, 32
        %s183 = sadd.s32 %s181, %s182
        %s184 = smul.addr %s183, 8
        %s185 = scalar_lea.vmem %s1, %s184
        %s186 = smul.u32 16, %s21
        %s187 = smul.u32 2, %s22
        %v188 = vld [vmem:[%s143] sm:$0xff]
        %v189 = vld [vmem:[%s143 + $0x8] sm:$0xff]
        %v190 = vld [vmem:[%s143 + $0x10] sm:$0xff]
        %v191 = vld [vmem:[%s143 + $0x18] sm:$0xff]
        %v192 = vld [vmem:[%s143 + $0x20] sm:$0xff]
        %v193 = vld [vmem:[%s143 + $0x28] sm:$0xff]
        %v194 = vld [vmem:[%s143 + $0x30] sm:$0xff]
        %v195 = vld [vmem:[%s143 + $0x38] sm:$0xff]
        %196 = vxpose.xlu0.b32.start [1/16] %v188, 128
        %197 = vxpose.xlu0.b32.cont [2/16] %v189, 128
        %198 = vxpose.xlu0.b32.cont [3/16] 0.0, 128
        %199 = vxpose.xlu0.b32.cont [4/16] 0.0, 128
        %200 = vxpose.xlu0.b32.cont [5/16] 0.0, 128
        %201 = vxpose.xlu0.b32.cont [6/16] 0.0, 128
        %202 = vxpose.xlu0.b32.cont [7/16] 0.0, 128
        %203 = vxpose.xlu0.b32.cont [8/16] 0.0, 128
        %204 = vxpose.xlu0.b32.cont [9/16] 0.0, 128
        %205 = vxpose.xlu0.b32.cont [10/16] 0.0, 128
        %206 = vxpose.xlu0.b32.cont [11/16] 0.0, 128
        %207 = vxpose.xlu0.b32.cont [12/16] 0.0, 128
        %208 = vxpose.xlu0.b32.cont [13/16] 0.0, 128
        %209 = vxpose.xlu0.b32.cont [14/16] 0.0, 128
        %210 = vxpose.xlu0.b32.cont [15/16] 0.0, 128
        %211 = vxpose.xlu0.b32.end [16/16] 0.0, 128
        %v212 = vpop.trf.xlu0
        %v213 = vpop.trf.xlu0
        %v214 = vpop.trf.xlu0
        %v215 = vpop.trf.xlu0
        %v216 = vpop.trf.xlu0
        %v217 = vpop.trf.xlu0
        %v218 = vpop.trf.xlu0
        %v219 = vpop.trf.xlu0
        %v220 = vpop.trf.xlu0
        %v221 = vpop.trf.xlu0
        %v222 = vpop.trf.xlu0
        %v223 = vpop.trf.xlu0
        %v224 = vpop.trf.xlu0
        %v225 = vpop.trf.xlu0
        %v226 = vpop.trf.xlu0
        %v227 = vpop.trf.xlu0
        %228 = vxpose.xlu0.b32.start [1/16] %v190, 128
        %229 = vxpose.xlu0.b32.cont [2/16] %v191, 128
        %230 = vxpose.xlu0.b32.cont [3/16] 0.0, 128
        %231 = vxpose.xlu0.b32.cont [4/16] 0.0, 128
        %232 = vxpose.xlu0.b32.cont [5/16] 0.0, 128
        %233 = vxpose.xlu0.b32.cont [6/16] 0.0, 128
        %234 = vxpose.xlu0.b32.cont [7/16] 0.0, 128
        %235 = vxpose.xlu0.b32.cont [8/16] 0.0, 128
        %236 = vxpose.xlu0.b32.cont [9/16] 0.0, 128
        %237 = vxpose.xlu0.b32.cont [10/16] 0.0, 128
        %238 = vxpose.xlu0.b32.cont [11/16] 0.0, 128
        %239 = vxpose.xlu0.b32.cont [12/16] 0.0, 128
        %240 = vxpose.xlu0.b32.cont [13/16] 0.0, 128
        %241 = vxpose.xlu0.b32.cont [14/16] 0.0, 128
        %242 = vxpose.xlu0.b32.cont [15/16] 0.0, 128
        %243 = vxpose.xlu0.b32.end [16/16] 0.0, 128
        %v244 = vpop.trf.xlu0
        %v245 = vpop.trf.xlu0
        %v246 = vpop.trf.xlu0
        %v247 = vpop.trf.xlu0
        %v248 = vpop.trf.xlu0
        %v249 = vpop.trf.xlu0
        %v250 = vpop.trf.xlu0
        %v251 = vpop.trf.xlu0
        %v252 = vpop.trf.xlu0
        %v253 = vpop.trf.xlu0
        %v254 = vpop.trf.xlu0
        %v255 = vpop.trf.xlu0
        %v256 = vpop.trf.xlu0
        %v257 = vpop.trf.xlu0
        %v258 = vpop.trf.xlu0
        %v259 = vpop.trf.xlu0
        %260 = vxpose.xlu0.b32.start [1/16] %v192, 128
        %261 = vxpose.xlu0.b32.cont [2/16] %v193, 128
        %262 = vxpose.xlu0.b32.cont [3/16] 0.0, 128
        %263 = vxpose.xlu0.b32.cont [4/16] 0.0, 128
        %264 = vxpose.xlu0.b32.cont [5/16] 0.0, 128
        %265 = vxpose.xlu0.b32.cont [6/16] 0.0, 128
        %266 = vxpose.xlu0.b32.cont [7/16] 0.0, 128
        %267 = vxpose.xlu0.b32.cont [8/16] 0.0, 128
        %268 = vxpose.xlu0.b32.cont [9/16] 0.0, 128
        %269 = vxpose.xlu0.b32.cont [10/16] 0.0, 128
        %270 = vxpose.xlu0.b32.cont [11/16] 0.0, 128
        %271 = vxpose.xlu0.b32.cont [12/16] 0.0, 128
        %272 = vxpose.xlu0.b32.cont [13/16] 0.0, 128
        %273 = vxpose.xlu0.b32.cont [14/16] 0.0, 128
        %274 = vxpose.xlu0.b32.cont [15/16] 0.0, 128
        %275 = vxpose.xlu0.b32.end [16/16] 0.0, 128
        %v276 = vpop.trf.xlu0
        %v277 = vpop.trf.xlu0
        %v278 = vpop.trf.xlu0
        %v279 = vpop.trf.xlu0
        %v280 = vpop.trf.xlu0
        %v281 = vpop.trf.xlu0
        %v282 = vpop.trf.xlu0
        %v283 = vpop.trf.xlu0
        %v284 = vpop.trf.xlu0
        %v285 = vpop.trf.xlu0
        %v286 = vpop.trf.xlu0
        %v287 = vpop.trf.xlu0
        %v288 = vpop.trf.xlu0
        %v289 = vpop.trf.xlu0
        %v290 = vpop.trf.xlu0
        %v291 = vpop.trf.xlu0
        %292 = vxpose.xlu0.b32.start [1/16] %v194, 128
        %293 = vxpose.xlu0.b32.cont [2/16] %v195, 128
        %294 = vxpose.xlu0.b32.cont [3/16] 0.0, 128
        %295 = vxpose.xlu0.b32.cont [4/16] 0.0, 128
        %296 = vxpose.xlu0.b32.cont [5/16] 0.0, 128
        %297 = vxpose.xlu0.b32.cont [6/16] 0.0, 128
        %298 = vxpose.xlu0.b32.cont [7/16] 0.0, 128
        %299 = vxpose.xlu0.b32.cont [8/16] 0.0, 128
        %300 = vxpose.xlu0.b32.cont [9/16] 0.0, 128
        %301 = vxpose.xlu0.b32.cont [10/16] 0.0, 128
        %302 = vxpose.xlu0.b32.cont [11/16] 0.0, 128
        %303 = vxpose.xlu0.b32.cont [12/16] 0.0, 128
        %304 = vxpose.xlu0.b32.cont [13/16] 0.0, 128
        %305 = vxpose.xlu0.b32.cont [14/16] 0.0, 128
        %306 = vxpose.xlu0.b32.cont [15/16] 0.0, 128
        %307 = vxpose.xlu0.b32.end [16/16] 0.0, 128
        %v308 = vpop.trf.xlu0
        %v309 = vpop.trf.xlu0
        %v310 = vpop.trf.xlu0
        %v311 = vpop.trf.xlu0
        %v312 = vpop.trf.xlu0
        %v313 = vpop.trf.xlu0
        %v314 = vpop.trf.xlu0
        %v315 = vpop.trf.xlu0
        %v316 = vpop.trf.xlu0
        %v317 = vpop.trf.xlu0
        %v318 = vpop.trf.xlu0
        %v319 = vpop.trf.xlu0
        %v320 = vpop.trf.xlu0
        %v321 = vpop.trf.xlu0
        %v322 = vpop.trf.xlu0
        %v323 = vpop.trf.xlu0
        %v324 = vcombine.low %v212, %v276
        %v325 = vcombine.high %v212, %v276
        %v327 = vunpack.c.l.s4 1983009808
        %v328 = vunpack.c.0.s8 %v327
        %v329 = vlaneseq
        %v330 = vshrl.u32 %v329, 7
        %v331 = vsub.s32 %v328, %v330
        %v332 = vrot.slane %v324, %v331
        %v334 = vunpack.c.l.s4 1983009808
        %v335 = vunpack.c.0.s8 %v334
        %v336 = vlaneseq
        %v337 = vshrl.u32 %v336, 7
        %v338 = vsub.s32 %v335, %v337
        %v339 = vrot.slane %v325, %v338
        %v340 = vcombine.low %v244, %v308
        %v341 = vcombine.high %v244, %v308
        %v343 = vunpack.c.l.s4 1983009808
        %v344 = vunpack.c.0.s8 %v343
        %v345 = vlaneseq
        %v346 = vshrl.u32 %v345, 7
        %v347 = vsub.s32 %v344, %v346
        %v348 = vrot.slane %v340, %v347
        %v350 = vunpack.c.l.s4 1983009808
        %v351 = vunpack.c.0.s8 %v350
        %v352 = vlaneseq
        %v353 = vshrl.u32 %v352, 7
        %v354 = vsub.s32 %v351, %v353
        %v355 = vrot.slane %v341, %v354
        %v356 = vcombine.low %v332, %v348
        %v357 = vcombine.high %v332, %v348
        %v359 = vunpack.c.l.s4 1934713408
        %v360 = vunpack.c.0.s8 %v359
        %v361 = vlaneseq
        %v362 = vshrl.u32 %v361, 7
        %v363 = vsub.s32 %v360, %v362
        %v364 = vrot.slane %v356, %v363
        %v366 = vunpack.c.l.s4 1934713408
        %v367 = vunpack.c.0.s8 %v366
        %v368 = vlaneseq
        %v369 = vshrl.u32 %v368, 7
        %v370 = vsub.s32 %v367, %v369
        %v371 = vrot.slane %v357, %v370
        %v372 = vcombine.low %v339, %v355
        %v373 = vcombine.high %v339, %v355
        %v375 = vunpack.c.l.s4 1934713408
        %v376 = vunpack.c.0.s8 %v375
        %v377 = vlaneseq
        %v378 = vshrl.u32 %v377, 7
        %v379 = vsub.s32 %v376, %v378
        %v380 = vrot.slane %v372, %v379
        %v382 = vunpack.c.l.s4 1934713408
        %v383 = vunpack.c.0.s8 %v382
        %v384 = vlaneseq
        %v385 = vshrl.u32 %v384, 7
        %v386 = vsub.s32 %v383, %v385
        %v387 = vrot.slane %v373, %v386
        %v388 = vcombine.high %v364, 0.0
        %v389 = vcombine.high %v371, 0.0
        %v390 = vcombine.high %v380, 0.0
        %v391 = vcombine.high %v387, 0.0
        %v392 = vcombine.low %v213, %v277
        %v393 = vcombine.high %v213, %v277
        %v395 = vunpack.c.l.s4 1983009808
        %v396 = vunpack.c.0.s8 %v395
        %v397 = vlaneseq
        %v398 = vshrl.u32 %v397, 7
        %v399 = vsub.s32 %v396, %v398
        %v400 = vrot.slane %v392, %v399
        %v402 = vunpack.c.l.s4 1983009808
        %v403 = vunpack.c.0.s8 %v402
        %v404 = vlaneseq
        %v405 = vshrl.u32 %v404, 7
        %v406 = vsub.s32 %v403, %v405
        %v407 = vrot.slane %v393, %v406
        %v408 = vcombine.low %v245, %v309
        %v409 = vcombine.high %v245, %v309
        %v411 = vunpack.c.l.s4 1983009808
        %v412 = vunpack.c.0.s8 %v411
        %v413 = vlaneseq
        %v414 = vshrl.u32 %v413, 7
        %v415 = vsub.s32 %v412, %v414
        %v416 = vrot.slane %v408, %v415
        %v418 = vunpack.c.l.s4 1983009808
        %v419 = vunpack.c.0.s8 %v418
        %v420 = vlaneseq
        %v421 = vshrl.u32 %v420, 7
        %v422 = vsub.s32 %v419, %v421
        %v423 = vrot.slane %v409, %v422
        %v424 = vcombine.low %v400, %v416
        %v425 = vcombine.high %v400, %v416
        %v427 = vunpack.c.l.s4 1934713408
        %v428 = vunpack.c.0.s8 %v427
        %v429 = vlaneseq
        %v430 = vshrl.u32 %v429, 7
        %v431 = vsub.s32 %v428, %v430
        %v432 = vrot.slane %v424, %v431
        %v434 = vunpack.c.l.s4 1934713408
        %v435 = vunpack.c.0.s8 %v434
        %v436 = vlaneseq
        %v437 = vshrl.u32 %v436, 7
        %v438 = vsub.s32 %v435, %v437
        %v439 = vrot.slane %v425, %v438
        %v440 = vcombine.low %v407, %v423
        %v441 = vcombine.high %v407, %v423
        %v443 = vunpack.c.l.s4 1934713408
        %v444 = vunpack.c.0.s8 %v443
        %v445 = vlaneseq
        %v446 = vshrl.u32 %v445, 7
        %v447 = vsub.s32 %v444, %v446
        %v448 = vrot.slane %v440, %v447
        %v450 = vunpack.c.l.s4 1934713408
        %v451 = vunpack.c.0.s8 %v450
        %v452 = vlaneseq
        %v453 = vshrl.u32 %v452, 7
        %v454 = vsub.s32 %v451, %v453
        %v455 = vrot.slane %v441, %v454
        %v456 = vcombine.high %v432, 0.0
        %v457 = vcombine.high %v439, 0.0
        %v458 = vcombine.high %v448, 0.0
        %v459 = vcombine.high %v455, 0.0
        %460 = vxpose.xlu0.b32.start [1/16] %v364, 128
        %461 = vxpose.xlu0.b32.cont [2/16] 0.0, 128
        %462 = vxpose.xlu0.b32.cont [3/16] 0.0, 128
        %463 = vxpose.xlu0.b32.cont [4/16] 0.0, 128
        %464 = vxpose.xlu0.b32.cont [5/16] 0.0, 128
        %465 = vxpose.xlu0.b32.cont [6/16] 0.0, 128
        %466 = vxpose.xlu0.b32.cont [7/16] 0.0, 128
        %467 = vxpose.xlu0.b32.cont [8/16] 0.0, 128
        %468 = vxpose.xlu0.b32.cont [9/16] 0.0, 128
        %469 = vxpose.xlu0.b32.cont [10/16] 0.0, 128
        %470 = vxpose.xlu0.b32.cont [11/16] 0.0, 128
        %471 = vxpose.xlu0.b32.cont [12/16] 0.0, 128
        %472 = vxpose.xlu0.b32.cont [13/16] 0.0, 128
        %473 = vxpose.xlu0.b32.cont [14/16] 0.0, 128
        %474 = vxpose.xlu0.b32.cont [15/16] 0.0, 128
        %475 = vxpose.xlu0.b32.end [16/16] 0.0, 128
        %v476 = vpop.trf.xlu0
        %v477 = vpop.trf.xlu0
        %v478 = vpop.trf.xlu0
        %v479 = vpop.trf.xlu0
        %v480 = vpop.trf.xlu0
        %v481 = vpop.trf.xlu0
        %v482 = vpop.trf.xlu0
        %v483 = vpop.trf.xlu0
        %v484 = vpop.trf.xlu0
        %v485 = vpop.trf.xlu0
        %v486 = vpop.trf.xlu0
        %v487 = vpop.trf.xlu0
        %v488 = vpop.trf.xlu0
        %v489 = vpop.trf.xlu0
        %v490 = vpop.trf.xlu0
        %v491 = vpop.trf.xlu0
        %492 = vxpose.xlu0.b32.start [1/16] %v388, 128
        %493 = vxpose.xlu0.b32.cont [2/16] 0.0, 128
        %494 = vxpose.xlu0.b32.cont [3/16] 0.0, 128
        %495 = vxpose.xlu0.b32.cont [4/16] 0.0, 128
        %496 = vxpose.xlu0.b32.cont [5/16] 0.0, 128
        %497 = vxpose.xlu0.b32.cont [6/16] 0.0, 128
        %498 = vxpose.xlu0.b32.cont [7/16] 0.0, 128
        %499 = vxpose.xlu0.b32.cont [8/16] 0.0, 128
        %500 = vxpose.xlu0.b32.cont [9/16] 0.0, 128
        %501 = vxpose.xlu0.b32.cont [10/16] 0.0, 128
        %502 = vxpose.xlu0.b32.cont [11/16] 0.0, 128
        %503 = vxpose.xlu0.b32.cont [12/16] 0.0, 128
        %504 = vxpose.xlu0.b32.cont [13/16] 0.0, 128
        %505 = vxpose.xlu0.b32.cont [14/16] 0.0, 128
        %506 = vxpose.xlu0.b32.cont [15/16] 0.0, 128
        %507 = vxpose.xlu0.b32.end [16/16] 0.0, 128
        %v508 = vpop.trf.xlu0
        %v509 = vpop.trf.xlu0
        %v510 = vpop.trf.xlu0
        %v511 = vpop.trf.xlu0
        %v512 = vpop.trf.xlu0
        %v513 = vpop.trf.xlu0
        %v514 = vpop.trf.xlu0
        %v515 = vpop.trf.xlu0
        %v516 = vpop.trf.xlu0
        %v517 = vpop.trf.xlu0
        %v518 = vpop.trf.xlu0
        %v519 = vpop.trf.xlu0
        %v520 = vpop.trf.xlu0
        %v521 = vpop.trf.xlu0
        %v522 = vpop.trf.xlu0
        %v523 = vpop.trf.xlu0
        %524 = vxpose.xlu0.b32.start [1/16] %v371, 128
        %525 = vxpose.xlu0.b32.cont [2/16] 0.0, 128
        %526 = vxpose.xlu0.b32.cont [3/16] 0.0, 128
        %527 = vxpose.xlu0.b32.cont [4/16] 0.0, 128
        %528 = vxpose.xlu0.b32.cont [5/16] 0.0, 128
        %529 = vxpose.xlu0.b32.cont [6/16] 0.0, 128
        %530 = vxpose.xlu0.b32.cont [7/16] 0.0, 128
        %531 = vxpose.xlu0.b32.cont [8/16] 0.0, 128
        %532 = vxpose.xlu0.b32.cont [9/16] 0.0, 128
        %533 = vxpose.xlu0.b32.cont [10/16] 0.0, 128
        %534 = vxpose.xlu0.b32.cont [11/16] 0.0, 128
        %535 = vxpose.xlu0.b32.cont [12/16] 0.0, 128
        %536 = vxpose.xlu0.b32.cont [13/16] 0.0, 128
        %537 = vxpose.xlu0.b32.cont [14/16] 0.0, 128
        %538 = vxpose.xlu0.b32.cont [15/16] 0.0, 128
        %539 = vxpose.xlu0.b32.end [16/16] 0.0, 128
        %v540 = vpop.trf.xlu0
        %v541 = vpop.trf.xlu0
        %v542 = vpop.trf.xlu0
        %v543 = vpop.trf.xlu0
        %v544 = vpop.trf.xlu0
        %v545 = vpop.trf.xlu0
        %v546 = vpop.trf.xlu0
        %v547 = vpop.trf.xlu0
        %v548 = vpop.trf.xlu0
        %v549 = vpop.trf.xlu0
        %v550 = vpop.trf.xlu0
        %v551 = vpop.trf.xlu0
        %v552 = vpop.trf.xlu0
        %v553 = vpop.trf.xlu0
        %v554 = vpop.trf.xlu0
        %v555 = vpop.trf.xlu0
        %556 = vxpose.xlu0.b32.start [1/16] %v389, 128
        %557 = vxpose.xlu0.b32.cont [2/16] 0.0, 128
        %558 = vxpose.xlu0.b32.cont [3/16] 0.0, 128
        %559 = vxpose.xlu0.b32.cont [4/16] 0.0, 128
        %560 = vxpose.xlu0.b32.cont [5/16] 0.0, 128
        %561 = vxpose.xlu0.b32.cont [6/16] 0.0, 128
        %562 = vxpose.xlu0.b32.cont [7/16] 0.0, 128
        %563 = vxpose.xlu0.b32.cont [8/16] 0.0, 128
        %564 = vxpose.xlu0.b32.cont [9/16] 0.0, 128
        %565 = vxpose.xlu0.b32.cont [10/16] 0.0, 128
        %566 = vxpose.xlu0.b32.cont [11/16] 0.0, 128
        %567 = vxpose.xlu0.b32.cont [12/16] 0.0, 128
        %568 = vxpose.xlu0.b32.cont [13/16] 0.0, 128
        %569 = vxpose.xlu0.b32.cont [14/16] 0.0, 128
        %570 = vxpose.xlu0.b32.cont [15/16] 0.0, 128
        %571 = vxpose.xlu0.b32.end [16/16] 0.0, 128
        %v572 = vpop.trf.xlu0
        %v573 = vpop.trf.xlu0
        %v574 = vpop.trf.xlu0
        %v575 = vpop.trf.xlu0
        %v576 = vpop.trf.xlu0
        %v577 = vpop.trf.xlu0
        %v578 = vpop.trf.xlu0
        %v579 = vpop.trf.xlu0
        %v580 = vpop.trf.xlu0
        %v581 = vpop.trf.xlu0
        %v582 = vpop.trf.xlu0
        %v583 = vpop.trf.xlu0
        %v584 = vpop.trf.xlu0
        %v585 = vpop.trf.xlu0
        %v586 = vpop.trf.xlu0
        %v587 = vpop.trf.xlu0
        %588 = vxpose.xlu0.b32.start [1/16] %v380, 128
        %589 = vxpose.xlu0.b32.cont [2/16] 0.0, 128
        %590 = vxpose.xlu0.b32.cont [3/16] 0.0, 128
        %591 = vxpose.xlu0.b32.cont [4/16] 0.0, 128
        %592 = vxpose.xlu0.b32.cont [5/16] 0.0, 128
        %593 = vxpose.xlu0.b32.cont [6/16] 0.0, 128
        %594 = vxpose.xlu0.b32.cont [7/16] 0.0, 128
        %595 = vxpose.xlu0.b32.cont [8/16] 0.0, 128
        %596 = vxpose.xlu0.b32.cont [9/16] 0.0, 128
        %597 = vxpose.xlu0.b32.cont [10/16] 0.0, 128
        %598 = vxpose.xlu0.b32.cont [11/16] 0.0, 128
        %599 = vxpose.xlu0.b32.cont [12/16] 0.0, 128
        %600 = vxpose.xlu0.b32.cont [13/16] 0.0, 128
        %601 = vxpose.xlu0.b32.cont [14/16] 0.0, 128
        %602 = vxpose.xlu0.b32.cont [15/16] 0.0, 128
        %603 = vxpose.xlu0.b32.end [16/16] 0.0, 128
        %v604 = vpop.trf.xlu0
        %v605 = vpop.trf.xlu0
        %v606 = vpop.trf.xlu0
        %v607 = vpop.trf.xlu0
        %v608 = vpop.trf.xlu0
        %v609 = vpop.trf.xlu0
        %v610 = vpop.trf.xlu0
        %v611 = vpop.trf.xlu0
        %v612 = vpop.trf.xlu0
        %v613 = vpop.trf.xlu0
        %v614 = vpop.trf.xlu0
        %v615 = vpop.trf.xlu0
        %v616 = vpop.trf.xlu0
        %v617 = vpop.trf.xlu0
        %v618 = vpop.trf.xlu0
        %v619 = vpop.trf.xlu0
        %620 = vxpose.xlu0.b32.start [1/16] %v390, 128
        %621 = vxpose.xlu0.b32.cont [2/16] 0.0, 128
        %622 = vxpose.xlu0.b32.cont [3/16] 0.0, 128
        %623 = vxpose.xlu0.b32.cont [4/16] 0.0, 128
        %624 = vxpose.xlu0.b32.cont [5/16] 0.0, 128
        %625 = vxpose.xlu0.b32.cont [6/16] 0.0, 128
        %626 = vxpose.xlu0.b32.cont [7/16] 0.0, 128
        %627 = vxpose.xlu0.b32.cont [8/16] 0.0, 128
        %628 = vxpose.xlu0.b32.cont [9/16] 0.0, 128
        %629 = vxpose.xlu0.b32.cont [10/16] 0.0, 128
        %630 = vxpose.xlu0.b32.cont [11/16] 0.0, 128
        %631 = vxpose.xlu0.b32.cont [12/16] 0.0, 128
        %632 = vxpose.xlu0.b32.cont [13/16] 0.0, 128
        %633 = vxpose.xlu0.b32.cont [14/16] 0.0, 128
        %634 = vxpose.xlu0.b32.cont [15/16] 0.0, 128
        %635 = vxpose.xlu0.b32.end [16/16] 0.0, 128
        %v636 = vpop.trf.xlu0
        %v637 = vpop.trf.xlu0
        %v638 = vpop.trf.xlu0
        %v639 = vpop.trf.xlu0
        %v640 = vpop.trf.xlu0
        %v641 = vpop.trf.xlu0
        %v642 = vpop.trf.xlu0
        %v643 = vpop.trf.xlu0
        %v644 = vpop.trf.xlu0
        %v645 = vpop.trf.xlu0
        %v646 = vpop.trf.xlu0
        %v647 = vpop.trf.xlu0
        %v648 = vpop.trf.xlu0
        %v649 = vpop.trf.xlu0
        %v650 = vpop.trf.xlu0
        %v651 = vpop.trf.xlu0
        %652 = vxpose.xlu0.b32.start [1/16] %v387, 128
        %653 = vxpose.xlu0.b32.cont [2/16] 0.0, 128
        %654 = vxpose.xlu0.b32.cont [3/16] 0.0, 128
        %655 = vxpose.xlu0.b32.cont [4/16] 0.0, 128
        %656 = vxpose.xlu0.b32.cont [5/16] 0.0, 128
        %657 = vxpose.xlu0.b32.cont [6/16] 0.0, 128
        %658 = vxpose.xlu0.b32.cont [7/16] 0.0, 128
        %659 = vxpose.xlu0.b32.cont [8/16] 0.0, 128
        %660 = vxpose.xlu0.b32.cont [9/16] 0.0, 128
        %661 = vxpose.xlu0.b32.cont [10/16] 0.0, 128
        %662 = vxpose.xlu0.b32.cont [11/16] 0.0, 128
        %663 = vxpose.xlu0.b32.cont [12/16] 0.0, 128
        %664 = vxpose.xlu0.b32.cont [13/16] 0.0, 128
        %665 = vxpose.xlu0.b32.cont [14/16] 0.0, 128
        %666 = vxpose.xlu0.b32.cont [15/16] 0.0, 128
        %667 = vxpose.xlu0.b32.end [16/16] 0.0, 128
        %v668 = vpop.trf.xlu0
        %v669 = vpop.trf.xlu0
        %v670 = vpop.trf.xlu0
        %v671 = vpop.trf.xlu0
        %v672 = vpop.trf.xlu0
        %v673 = vpop.trf.xlu0
        %v674 = vpop.trf.xlu0
        %v675 = vpop.trf.xlu0
        %v676 = vpop.trf.xlu0
        %v677 = vpop.trf.xlu0
        %v678 = vpop.trf.xlu0
        %v679 = vpop.trf.xlu0
        %v680 = vpop.trf.xlu0
        %v681 = vpop.trf.xlu0
        %v682 = vpop.trf.xlu0
        %v683 = vpop.trf.xlu0
        %684 = vxpose.xlu0.b32.start [1/16] %v391, 128
        %685 = vxpose.xlu0.b32.cont [2/16] 0.0, 128
        %686 = vxpose.xlu0.b32.cont [3/16] 0.0, 128
        %687 = vxpose.xlu0.b32.cont [4/16] 0.0, 128
        %688 = vxpose.xlu0.b32.cont [5/16] 0.0, 128
        %689 = vxpose.xlu0.b32.cont [6/16] 0.0, 128
        %690 = vxpose.xlu0.b32.cont [7/16] 0.0, 128
        %691 = vxpose.xlu0.b32.cont [8/16] 0.0, 128
        %692 = vxpose.xlu0.b32.cont [9/16] 0.0, 128
        %693 = vxpose.xlu0.b32.cont [10/16] 0.0, 128
        %694 = vxpose.xlu0.b32.cont [11/16] 0.0, 128
        %695 = vxpose.xlu0.b32.cont [12/16] 0.0, 128
        %696 = vxpose.xlu0.b32.cont [13/16] 0.0, 128
        %697 = vxpose.xlu0.b32.cont [14/16] 0.0, 128
        %698 = vxpose.xlu0.b32.cont [15/16] 0.0, 128
        %699 = vxpose.xlu0.b32.end [16/16] 0.0, 128
        %v700 = vpop.trf.xlu0
        %v701 = vpop.trf.xlu0
        %v702 = vpop.trf.xlu0
        %v703 = vpop.trf.xlu0
        %v704 = vpop.trf.xlu0
        %v705 = vpop.trf.xlu0
        %v706 = vpop.trf.xlu0
        %v707 = vpop.trf.xlu0
        %v708 = vpop.trf.xlu0
        %v709 = vpop.trf.xlu0
        %v710 = vpop.trf.xlu0
        %v711 = vpop.trf.xlu0
        %v712 = vpop.trf.xlu0
        %v713 = vpop.trf.xlu0
        %v714 = vpop.trf.xlu0
        %v715 = vpop.trf.xlu0
        %716 = vxpose.xlu0.b32.start [1/16] %v432, 128
        %717 = vxpose.xlu0.b32.cont [2/16] 0.0, 128
        %718 = vxpose.xlu0.b32.cont [3/16] 0.0, 128
        %719 = vxpose.xlu0.b32.cont [4/16] 0.0, 128
        %720 = vxpose.xlu0.b32.cont [5/16] 0.0, 128
        %721 = vxpose.xlu0.b32.cont [6/16] 0.0, 128
        %722 = vxpose.xlu0.b32.cont [7/16] 0.0, 128
        %723 = vxpose.xlu0.b32.cont [8/16] 0.0, 128
        %724 = vxpose.xlu0.b32.cont [9/16] 0.0, 128
        %725 = vxpose.xlu0.b32.cont [10/16] 0.0, 128
        %726 = vxpose.xlu0.b32.cont [11/16] 0.0, 128
        %727 = vxpose.xlu0.b32.cont [12/16] 0.0, 128
        %728 = vxpose.xlu0.b32.cont [13/16] 0.0, 128
        %729 = vxpose.xlu0.b32.cont [14/16] 0.0, 128
        %730 = vxpose.xlu0.b32.cont [15/16] 0.0, 128
        %731 = vxpose.xlu0.b32.end [16/16] 0.0, 128
        %v732 = vpop.trf.xlu0
        %v733 = vpop.trf.xlu0
        %v734 = vpop.trf.xlu0
        %v735 = vpop.trf.xlu0
        %v736 = vpop.trf.xlu0
        %v737 = vpop.trf.xlu0
        %v738 = vpop.trf.xlu0
        %v739 = vpop.trf.xlu0
        %v740 = vpop.trf.xlu0
        %v741 = vpop.trf.xlu0
        %v742 = vpop.trf.xlu0
        %v743 = vpop.trf.xlu0
        %v744 = vpop.trf.xlu0
        %v745 = vpop.trf.xlu0
        %v746 = vpop.trf.xlu0
        %v747 = vpop.trf.xlu0
        %748 = vxpose.xlu0.b32.start [1/16] %v456, 128
        %749 = vxpose.xlu0.b32.cont [2/16] 0.0, 128
        %750 = vxpose.xlu0.b32.cont [3/16] 0.0, 128
        %751 = vxpose.xlu0.b32.cont [4/16] 0.0, 128
        %752 = vxpose.xlu0.b32.cont [5/16] 0.0, 128
        %753 = vxpose.xlu0.b32.cont [6/16] 0.0, 128
        %754 = vxpose.xlu0.b32.cont [7/16] 0.0, 128
        %755 = vxpose.xlu0.b32.cont [8/16] 0.0, 128
        %756 = vxpose.xlu0.b32.cont [9/16] 0.0, 128
        %757 = vxpose.xlu0.b32.cont [10/16] 0.0, 128
        %758 = vxpose.xlu0.b32.cont [11/16] 0.0, 128
        %759 = vxpose.xlu0.b32.cont [12/16] 0.0, 128
        %760 = vxpose.xlu0.b32.cont [13/16] 0.0, 128
        %761 = vxpose.xlu0.b32.cont [14/16] 0.0, 128
        %762 = vxpose.xlu0.b32.cont [15/16] 0.0, 128
        %763 = vxpose.xlu0.b32.end [16/16] 0.0, 128
        %v764 = vpop.trf.xlu0
        %v765 = vpop.trf.xlu0
        %v766 = vpop.trf.xlu0
        %v767 = vpop.trf.xlu0
        %v768 = vpop.trf.xlu0
        %v769 = vpop.trf.xlu0
        %v770 = vpop.trf.xlu0
        %v771 = vpop.trf.xlu0
        %v772 = vpop.trf.xlu0
        %v773 = vpop.trf.xlu0
        %v774 = vpop.trf.xlu0
        %v775 = vpop.trf.xlu0
        %v776 = vpop.trf.xlu0
        %v777 = vpop.trf.xlu0
        %v778 = vpop.trf.xlu0
        %v779 = vpop.trf.xlu0
        %780 = vxpose.xlu0.b32.start [1/16] %v439, 128
        %781 = vxpose.xlu0.b32.cont [2/16] 0.0, 128
        %782 = vxpose.xlu0.b32.cont [3/16] 0.0, 128
        %783 = vxpose.xlu0.b32.cont [4/16] 0.0, 128
        %784 = vxpose.xlu0.b32.cont [5/16] 0.0, 128
        %785 = vxpose.xlu0.b32.cont [6/16] 0.0, 128
        %786 = vxpose.xlu0.b32.cont [7/16] 0.0, 128
        %787 = vxpose.xlu0.b32.cont [8/16] 0.0, 128
        %788 = vxpose.xlu0.b32.cont [9/16] 0.0, 128
        %789 = vxpose.xlu0.b32.cont [10/16] 0.0, 128
        %790 = vxpose.xlu0.b32.cont [11/16] 0.0, 128
        %791 = vxpose.xlu0.b32.cont [12/16] 0.0, 128
        %792 = vxpose.xlu0.b32.cont [13/16] 0.0, 128
        %793 = vxpose.xlu0.b32.cont [14/16] 0.0, 128
        %794 = vxpose.xlu0.b32.cont [15/16] 0.0, 128
        %795 = vxpose.xlu0.b32.end [16/16] 0.0, 128
        %v796 = vpop.trf.xlu0
        %v797 = vpop.trf.xlu0
        %v798 = vpop.trf.xlu0
        %v799 = vpop.trf.xlu0
        %v800 = vpop.trf.xlu0
        %v801 = vpop.trf.xlu0
        %v802 = vpop.trf.xlu0
        %v803 = vpop.trf.xlu0
        %v804 = vpop.trf.xlu0
        %v805 = vpop.trf.xlu0
        %v806 = vpop.trf.xlu0
        %v807 = vpop.trf.xlu0
        %v808 = vpop.trf.xlu0
        %v809 = vpop.trf.xlu0
        %v810 = vpop.trf.xlu0
        %v811 = vpop.trf.xlu0
        %812 = vxpose.xlu0.b32.start [1/16] %v457, 128
        %813 = vxpose.xlu0.b32.cont [2/16] 0.0, 128
        %814 = vxpose.xlu0.b32.cont [3/16] 0.0, 128
        %815 = vxpose.xlu0.b32.cont [4/16] 0.0, 128
        %816 = vxpose.xlu0.b32.cont [5/16] 0.0, 128
        %817 = vxpose.xlu0.b32.cont [6/16] 0.0, 128
        %818 = vxpose.xlu0.b32.cont [7/16] 0.0, 128
        %819 = vxpose.xlu0.b32.cont [8/16] 0.0, 128
        %820 = vxpose.xlu0.b32.cont [9/16] 0.0, 128
        %821 = vxpose.xlu0.b32.cont [10/16] 0.0, 128
        %822 = vxpose.xlu0.b32.cont [11/16] 0.0, 128
        %823 = vxpose.xlu0.b32.cont [12/16] 0.0, 128
        %824 = vxpose.xlu0.b32.cont [13/16] 0.0, 128
        %825 = vxpose.xlu0.b32.cont [14/16] 0.0, 128
        %826 = vxpose.xlu0.b32.cont [15/16] 0.0, 128
        %827 = vxpose.xlu0.b32.end [16/16] 0.0, 128
        %v828 = vpop.trf.xlu0
        %v829 = vpop.trf.xlu0
        %v830 = vpop.trf.xlu0
        %v831 = vpop.trf.xlu0
        %v832 = vpop.trf.xlu0
        %v833 = vpop.trf.xlu0
        %v834 = vpop.trf.xlu0
        %v835 = vpop.trf.xlu0
        %v836 = vpop.trf.xlu0
        %v837 = vpop.trf.xlu0
        %v838 = vpop.trf.xlu0
        %v839 = vpop.trf.xlu0
        %v840 = vpop.trf.xlu0
        %v841 = vpop.trf.xlu0
        %v842 = vpop.trf.xlu0
        %v843 = vpop.trf.xlu0
        %844 = vxpose.xlu0.b32.start [1/16] %v448, 128
        %845 = vxpose.xlu0.b32.cont [2/16] 0.0, 128
        %846 = vxpose.xlu0.b32.cont [3/16] 0.0, 128
        %847 = vxpose.xlu0.b32.cont [4/16] 0.0, 128
        %848 = vxpose.xlu0.b32.cont [5/16] 0.0, 128
        %849 = vxpose.xlu0.b32.cont [6/16] 0.0, 128
        %850 = vxpose.xlu0.b32.cont [7/16] 0.0, 128
        %851 = vxpose.xlu0.b32.cont [8/16] 0.0, 128
        %852 = vxpose.xlu0.b32.cont [9/16] 0.0, 128
        %853 = vxpose.xlu0.b32.cont [10/16] 0.0, 128
        %854 = vxpose.xlu0.b32.cont [11/16] 0.0, 128
        %855 = vxpose.xlu0.b32.cont [12/16] 0.0, 128
        %856 = vxpose.xlu0.b32.cont [13/16] 0.0, 128
        %857 = vxpose.xlu0.b32.cont [14/16] 0.0, 128
        %858 = vxpose.xlu0.b32.cont [15/16] 0.0, 128
        %859 = vxpose.xlu0.b32.end [16/16] 0.0, 128
        %v860 = vpop.trf.xlu0
        %v861 = vpop.trf.xlu0
        %v862 = vpop.trf.xlu0
        %v863 = vpop.trf.xlu0
        %v864 = vpop.trf.xlu0
        %v865 = vpop.trf.xlu0
        %v866 = vpop.trf.xlu0
        %v867 = vpop.trf.xlu0
        %v868 = vpop.trf.xlu0
        %v869 = vpop.trf.xlu0
        %v870 = vpop.trf.xlu0
        %v871 = vpop.trf.xlu0
        %v872 = vpop.trf.xlu0
        %v873 = vpop.trf.xlu0
        %v874 = vpop.trf.xlu0
        %v875 = vpop.trf.xlu0
        %876 = vxpose.xlu0.b32.start [1/16] %v458, 128
        %877 = vxpose.xlu0.b32.cont [2/16] 0.0, 128
        %878 = vxpose.xlu0.b32.cont [3/16] 0.0, 128
        %879 = vxpose.xlu0.b32.cont [4/16] 0.0, 128
        %880 = vxpose.xlu0.b32.cont [5/16] 0.0, 128
        %881 = vxpose.xlu0.b32.cont [6/16] 0.0, 128
        %882 = vxpose.xlu0.b32.cont [7/16] 0.0, 128
        %883 = vxpose.xlu0.b32.cont [8/16] 0.0, 128
        %884 = vxpose.xlu0.b32.cont [9/16] 0.0, 128
        %885 = vxpose.xlu0.b32.cont [10/16] 0.0, 128
        %886 = vxpose.xlu0.b32.cont [11/16] 0.0, 128
        %887 = vxpose.xlu0.b32.cont [12/16] 0.0, 128
        %888 = vxpose.xlu0.b32.cont [13/16] 0.0, 128
        %889 = vxpose.xlu0.b32.cont [14/16] 0.0, 128
        %890 = vxpose.xlu0.b32.cont [15/16] 0.0, 128
        %891 = vxpose.xlu0.b32.end [16/16] 0.0, 128
        %v892 = vpop.trf.xlu0
        %v893 = vpop.trf.xlu0
        %v894 = vpop.trf.xlu0
        %v895 = vpop.trf.xlu0
        %v896 = vpop.trf.xlu0
        %v897 = vpop.trf.xlu0
        %v898 = vpop.trf.xlu0
        %v899 = vpop.trf.xlu0
        %v900 = vpop.trf.xlu0
        %v901 = vpop.trf.xlu0
        %v902 = vpop.trf.xlu0
        %v903 = vpop.trf.xlu0
        %v904 = vpop.trf.xlu0
        %v905 = vpop.trf.xlu0
        %v906 = vpop.trf.xlu0
        %v907 = vpop.trf.xlu0
        %908 = vxpose.xlu0.b32.start [1/16] %v455, 128
        %909 = vxpose.xlu0.b32.cont [2/16] 0.0, 128
        %910 = vxpose.xlu0.b32.cont [3/16] 0.0, 128
        %911 = vxpose.xlu0.b32.cont [4/16] 0.0, 128
        %912 = vxpose.xlu0.b32.cont [5/16] 0.0, 128
        %913 = vxpose.xlu0.b32.cont [6/16] 0.0, 128
        %914 = vxpose.xlu0.b32.cont [7/16] 0.0, 128
        %915 = vxpose.xlu0.b32.cont [8/16] 0.0, 128
        %916 = vxpose.xlu0.b32.cont [9/16] 0.0, 128
        %917 = vxpose.xlu0.b32.cont [10/16] 0.0, 128
        %918 = vxpose.xlu0.b32.cont [11/16] 0.0, 128
        %919 = vxpose.xlu0.b32.cont [12/16] 0.0, 128
        %920 = vxpose.xlu0.b32.cont [13/16] 0.0, 128
        %921 = vxpose.xlu0.b32.cont [14/16] 0.0, 128
        %922 = vxpose.xlu0.b32.cont [15/16] 0.0, 128
        %923 = vxpose.xlu0.b32.end [16/16] 0.0, 128
        %v924 = vpop.trf.xlu0
        %v925 = vpop.trf.xlu0
        %v926 = vpop.trf.xlu0
        %v927 = vpop.trf.xlu0
        %v928 = vpop.trf.xlu0
        %v929 = vpop.trf.xlu0
        %v930 = vpop.trf.xlu0
        %v931 = vpop.trf.xlu0
        %v932 = vpop.trf.xlu0
        %v933 = vpop.trf.xlu0
        %v934 = vpop.trf.xlu0
        %v935 = vpop.trf.xlu0
        %v936 = vpop.trf.xlu0
        %v937 = vpop.trf.xlu0
        %v938 = vpop.trf.xlu0
        %v939 = vpop.trf.xlu0
        %940 = vxpose.xlu0.b32.start [1/16] %v459, 128
        %941 = vxpose.xlu0.b32.cont [2/16] 0.0, 128
        %942 = vxpose.xlu0.b32.cont [3/16] 0.0, 128
        %943 = vxpose.xlu0.b32.cont [4/16] 0.0, 128
        %944 = vxpose.xlu0.b32.cont [5/16] 0.0, 128
        %945 = vxpose.xlu0.b32.cont [6/16] 0.0, 128
        %946 = vxpose.xlu0.b32.cont [7/16] 0.0, 128
        %947 = vxpose.xlu0.b32.cont [8/16] 0.0, 128
        %948 = vxpose.xlu0.b32.cont [9/16] 0.0, 128
        %949 = vxpose.xlu0.b32.cont [10/16] 0.0, 128
        %950 = vxpose.xlu0.b32.cont [11/16] 0.0, 128
        %951 = vxpose.xlu0.b32.cont [12/16] 0.0, 128
        %952 = vxpose.xlu0.b32.cont [13/16] 0.0, 128
        %953 = vxpose.xlu0.b32.cont [14/16] 0.0, 128
        %954 = vxpose.xlu0.b32.cont [15/16] 0.0, 128
        %955 = vxpose.xlu0.b32.end [16/16] 0.0, 128
        %v956 = vpop.trf.xlu0
        %v957 = vpop.trf.xlu0
        %v958 = vpop.trf.xlu0
        %v959 = vpop.trf.xlu0
        %v960 = vpop.trf.xlu0
        %v961 = vpop.trf.xlu0
        %v962 = vpop.trf.xlu0
        %v963 = vpop.trf.xlu0
        %v964 = vpop.trf.xlu0
        %v965 = vpop.trf.xlu0
        %v966 = vpop.trf.xlu0
        %v967 = vpop.trf.xlu0
        %v968 = vpop.trf.xlu0
        %v969 = vpop.trf.xlu0
        %v970 = vpop.trf.xlu0
        %v971 = vpop.trf.xlu0
        %v972 = vcombine.low %v476, %v540
        %v973 = vcombine.high %v476, %v540
        %v975 = vunpack.c.l.s4 1983009808
        %v976 = vunpack.c.0.s8 %v975
        %v977 = vlaneseq
        %v978 = vshrl.u32 %v977, 7
        %v979 = vsub.s32 %v976, %v978
        %v980 = vrot.slane %v972, %v979
        %v982 = vunpack.c.l.s4 1983009808
        %v983 = vunpack.c.0.s8 %v982
        %v984 = vlaneseq
        %v985 = vshrl.u32 %v984, 7
        %v986 = vsub.s32 %v983, %v985
        %v987 = vrot.slane %v973, %v986
        %v988 = vcombine.low %v508, %v572
        %v989 = vcombine.high %v508, %v572
        %v991 = vunpack.c.l.s4 1983009808
        %v992 = vunpack.c.0.s8 %v991
        %v993 = vlaneseq
        %v994 = vshrl.u32 %v993, 7
        %v995 = vsub.s32 %v992, %v994
        %v996 = vrot.slane %v988, %v995
        %v998 = vunpack.c.l.s4 1983009808
        %v999 = vunpack.c.0.s8 %v998
        %v1000 = vlaneseq
        %v1001 = vshrl.u32 %v1000, 7
        %v1002 = vsub.s32 %v999, %v1001
        %v1003 = vrot.slane %v989, %v1002
        %v1004 = vcombine.low %v604, %v668
        %v1005 = vcombine.high %v604, %v668
        %v1007 = vunpack.c.l.s4 1983009808
        %v1008 = vunpack.c.0.s8 %v1007
        %v1009 = vlaneseq
        %v1010 = vshrl.u32 %v1009, 7
        %v1011 = vsub.s32 %v1008, %v1010
        %v1012 = vrot.slane %v1004, %v1011
        %v1014 = vunpack.c.l.s4 1983009808
        %v1015 = vunpack.c.0.s8 %v1014
        %v1016 = vlaneseq
        %v1017 = vshrl.u32 %v1016, 7
        %v1018 = vsub.s32 %v1015, %v1017
        %v1019 = vrot.slane %v1005, %v1018
        %v1020 = vcombine.low %v636, %v700
        %v1021 = vcombine.high %v636, %v700
        %v1023 = vunpack.c.l.s4 1983009808
        %v1024 = vunpack.c.0.s8 %v1023
        %v1025 = vlaneseq
        %v1026 = vshrl.u32 %v1025, 7
        %v1027 = vsub.s32 %v1024, %v1026
        %v1028 = vrot.slane %v1020, %v1027
        %v1030 = vunpack.c.l.s4 1983009808
        %v1031 = vunpack.c.0.s8 %v1030
        %v1032 = vlaneseq
        %v1033 = vshrl.u32 %v1032, 7
        %v1034 = vsub.s32 %v1031, %v1033
        %v1035 = vrot.slane %v1021, %v1034
        %v1036 = vcombine.low %v980, %v996
        %v1037 = vcombine.high %v980, %v996
        %v1039 = vunpack.c.l.s4 1934713408
        %v1040 = vunpack.c.0.s8 %v1039
        %v1041 = vlaneseq
        %v1042 = vshrl.u32 %v1041, 7
        %v1043 = vsub.s32 %v1040, %v1042
        %v1044 = vrot.slane %v1036, %v1043
        %v1046 = vunpack.c.l.s4 1934713408
        %v1047 = vunpack.c.0.s8 %v1046
        %v1048 = vlaneseq
        %v1049 = vshrl.u32 %v1048, 7
        %v1050 = vsub.s32 %v1047, %v1049
        %v1051 = vrot.slane %v1037, %v1050
        %v1052 = vcombine.low %v987, %v1003
        %v1053 = vcombine.high %v987, %v1003
        %v1055 = vunpack.c.l.s4 1934713408
        %v1056 = vunpack.c.0.s8 %v1055
        %v1057 = vlaneseq
        %v1058 = vshrl.u32 %v1057, 7
        %v1059 = vsub.s32 %v1056, %v1058
        %v1060 = vrot.slane %v1052, %v1059
        %v1062 = vunpack.c.l.s4 1934713408
        %v1063 = vunpack.c.0.s8 %v1062
        %v1064 = vlaneseq
        %v1065 = vshrl.u32 %v1064, 7
        %v1066 = vsub.s32 %v1063, %v1065
        %v1067 = vrot.slane %v1053, %v1066
        %v1068 = vcombine.low %v1012, %v1028
        %v1069 = vcombine.high %v1012, %v1028
        %v1071 = vunpack.c.l.s4 1934713408
        %v1072 = vunpack.c.0.s8 %v1071
        %v1073 = vlaneseq
        %v1074 = vshrl.u32 %v1073, 7
        %v1075 = vsub.s32 %v1072, %v1074
        %v1076 = vrot.slane %v1068, %v1075
        %v1078 = vunpack.c.l.s4 1934713408
        %v1079 = vunpack.c.0.s8 %v1078
        %v1080 = vlaneseq
        %v1081 = vshrl.u32 %v1080, 7
        %v1082 = vsub.s32 %v1079, %v1081
        %v1083 = vrot.slane %v1069, %v1082
        %v1084 = vcombine.low %v1019, %v1035
        %v1085 = vcombine.high %v1019, %v1035
        %v1087 = vunpack.c.l.s4 1934713408
        %v1088 = vunpack.c.0.s8 %v1087
        %v1089 = vlaneseq
        %v1090 = vshrl.u32 %v1089, 7
        %v1091 = vsub.s32 %v1088, %v1090
        %v1092 = vrot.slane %v1084, %v1091
        %v1094 = vunpack.c.l.s4 1934713408
        %v1095 = vunpack.c.0.s8 %v1094
        %v1096 = vlaneseq
        %v1097 = vshrl.u32 %v1096, 7
        %v1098 = vsub.s32 %v1095, %v1097
        %v1099 = vrot.slane %v1085, %v1098
        %v1100 = vcombine.low %v1044, %v1076
        %v1101 = vcombine.high %v1044, %v1076
        %v1102 = vcombine.low %v1051, %v1083
        %v1103 = vcombine.high %v1051, %v1083
        %v1104 = vcombine.low %v1060, %v1092
        %v1105 = vcombine.high %v1060, %v1092
        %v1106 = vcombine.low %v1067, %v1099
        %v1107 = vcombine.high %v1067, %v1099
        %v1108 = vcombine.low %v732, %v796
        %v1109 = vcombine.high %v732, %v796
        %v1111 = vunpack.c.l.s4 1983009808
        %v1112 = vunpack.c.0.s8 %v1111
        %v1113 = vlaneseq
        %v1114 = vshrl.u32 %v1113, 7
        %v1115 = vsub.s32 %v1112, %v1114
        %v1116 = vrot.slane %v1108, %v1115
        %v1118 = vunpack.c.l.s4 1983009808
        %v1119 = vunpack.c.0.s8 %v1118
        %v1120 = vlaneseq
        %v1121 = vshrl.u32 %v1120, 7
        %v1122 = vsub.s32 %v1119, %v1121
        %v1123 = vrot.slane %v1109, %v1122
        %v1124 = vcombine.low %v764, %v828
        %v1125 = vcombine.high %v764, %v828
        %v1127 = vunpack.c.l.s4 1983009808
        %v1128 = vunpack.c.0.s8 %v1127
        %v1129 = vlaneseq
        %v1130 = vshrl.u32 %v1129, 7
        %v1131 = vsub.s32 %v1128, %v1130
        %v1132 = vrot.slane %v1124, %v1131
        %v1134 = vunpack.c.l.s4 1983009808
        %v1135 = vunpack.c.0.s8 %v1134
        %v1136 = vlaneseq
        %v1137 = vshrl.u32 %v1136, 7
        %v1138 = vsub.s32 %v1135, %v1137
        %v1139 = vrot.slane %v1125, %v1138
        %v1140 = vcombine.low %v860, %v924
        %v1141 = vcombine.high %v860, %v924
        %v1143 = vunpack.c.l.s4 1983009808
        %v1144 = vunpack.c.0.s8 %v1143
        %v1145 = vlaneseq
        %v1146 = vshrl.u32 %v1145, 7
        %v1147 = vsub.s32 %v1144, %v1146
        %v1148 = vrot.slane %v1140, %v1147
        %v1150 = vunpack.c.l.s4 1983009808
        %v1151 = vunpack.c.0.s8 %v1150
        %v1152 = vlaneseq
        %v1153 = vshrl.u32 %v1152, 7
        %v1154 = vsub.s32 %v1151, %v1153
        %v1155 = vrot.slane %v1141, %v1154
        %v1156 = vcombine.low %v892, %v956
        %v1157 = vcombine.high %v892, %v956
        %v1159 = vunpack.c.l.s4 1983009808
        %v1160 = vunpack.c.0.s8 %v1159
        %v1161 = vlaneseq
        %v1162 = vshrl.u32 %v1161, 7
        %v1163 = vsub.s32 %v1160, %v1162
        %v1164 = vrot.slane %v1156, %v1163
        %v1166 = vunpack.c.l.s4 1983009808
        %v1167 = vunpack.c.0.s8 %v1166
        %v1168 = vlaneseq
        %v1169 = vshrl.u32 %v1168, 7
        %v1170 = vsub.s32 %v1167, %v1169
        %v1171 = vrot.slane %v1157, %v1170
        %v1172 = vcombine.low %v1116, %v1132
        %v1173 = vcombine.high %v1116, %v1132
        %v1175 = vunpack.c.l.s4 1934713408
        %v1176 = vunpack.c.0.s8 %v1175
        %v1177 = vlaneseq
        %v1178 = vshrl.u32 %v1177, 7
        %v1179 = vsub.s32 %v1176, %v1178
        %v1180 = vrot.slane %v1172, %v1179
        %v1182 = vunpack.c.l.s4 1934713408
        %v1183 = vunpack.c.0.s8 %v1182
        %v1184 = vlaneseq
        %v1185 = vshrl.u32 %v1184, 7
        %v1186 = vsub.s32 %v1183, %v1185
        %v1187 = vrot.slane %v1173, %v1186
        %v1188 = vcombine.low %v1123, %v1139
        %v1189 = vcombine.high %v1123, %v1139
        %v1191 = vunpack.c.l.s4 1934713408
        %v1192 = vunpack.c.0.s8 %v1191
        %v1193 = vlaneseq
        %v1194 = vshrl.u32 %v1193, 7
        %v1195 = vsub.s32 %v1192, %v1194
        %v1196 = vrot.slane %v1188, %v1195
        %v1198 = vunpack.c.l.s4 1934713408
        %v1199 = vunpack.c.0.s8 %v1198
        %v1200 = vlaneseq
        %v1201 = vshrl.u32 %v1200, 7
        %v1202 = vsub.s32 %v1199, %v1201
        %v1203 = vrot.slane %v1189, %v1202
        %v1204 = vcombine.low %v1148, %v1164
        %v1205 = vcombine.high %v1148, %v1164
        %v1207 = vunpack.c.l.s4 1934713408
        %v1208 = vunpack.c.0.s8 %v1207
        %v1209 = vlaneseq
        %v1210 = vshrl.u32 %v1209, 7
        %v1211 = vsub.s32 %v1208, %v1210
        %v1212 = vrot.slane %v1204, %v1211
        %v1214 = vunpack.c.l.s4 1934713408
        %v1215 = vunpack.c.0.s8 %v1214
        %v1216 = vlaneseq
        %v1217 = vshrl.u32 %v1216, 7
        %v1218 = vsub.s32 %v1215, %v1217
        %v1219 = vrot.slane %v1205, %v1218
        %v1220 = vcombine.low %v1155, %v1171
        %v1221 = vcombine.high %v1155, %v1171
        %v1223 = vunpack.c.l.s4 1934713408
        %v1224 = vunpack.c.0.s8 %v1223
        %v1225 = vlaneseq
        %v1226 = vshrl.u32 %v1225, 7
        %v1227 = vsub.s32 %v1224, %v1226
        %v1228 = vrot.slane %v1220, %v1227
        %v1230 = vunpack.c.l.s4 1934713408
        %v1231 = vunpack.c.0.s8 %v1230
        %v1232 = vlaneseq
        %v1233 = vshrl.u32 %v1232, 7
        %v1234 = vsub.s32 %v1231, %v1233
        %v1235 = vrot.slane %v1221, %v1234
        %v1236 = vcombine.low %v1180, %v1212
        %v1237 = vcombine.high %v1180, %v1212
        %v1238 = vcombine.low %v1187, %v1219
        %v1239 = vcombine.high %v1187, %v1219
        %v1240 = vcombine.low %v1196, %v1228
        %v1241 = vcombine.high %v1196, %v1228
        %v1242 = vcombine.low %v1203, %v1235
        %v1243 = vcombine.high %v1203, %v1235
        %v1244 = vcombine.low %v477, %v541
        %v1245 = vcombine.high %v477, %v541
        %v1247 = vunpack.c.l.s4 1983009808
        %v1248 = vunpack.c.0.s8 %v1247
        %v1249 = vlaneseq
        %v1250 = vshrl.u32 %v1249, 7
        %v1251 = vsub.s32 %v1248, %v1250
        %v1252 = vrot.slane %v1244, %v1251
        %v1254 = vunpack.c.l.s4 1983009808
        %v1255 = vunpack.c.0.s8 %v1254
        %v1256 = vlaneseq
        %v1257 = vshrl.u32 %v1256, 7
        %v1258 = vsub.s32 %v1255, %v1257
        %v1259 = vrot.slane %v1245, %v1258
        %v1260 = vcombine.low %v509, %v573
        %v1261 = vcombine.high %v509, %v573
        %v1263 = vunpack.c.l.s4 1983009808
        %v1264 = vunpack.c.0.s8 %v1263
        %v1265 = vlaneseq
        %v1266 = vshrl.u32 %v1265, 7
        %v1267 = vsub.s32 %v1264, %v1266
        %v1268 = vrot.slane %v1260, %v1267
        %v1270 = vunpack.c.l.s4 1983009808
        %v1271 = vunpack.c.0.s8 %v1270
        %v1272 = vlaneseq
        %v1273 = vshrl.u32 %v1272, 7
        %v1274 = vsub.s32 %v1271, %v1273
        %v1275 = vrot.slane %v1261, %v1274
        %v1276 = vcombine.low %v605, %v669
        %v1277 = vcombine.high %v605, %v669
        %v1279 = vunpack.c.l.s4 1983009808
        %v1280 = vunpack.c.0.s8 %v1279
        %v1281 = vlaneseq
        %v1282 = vshrl.u32 %v1281, 7
        %v1283 = vsub.s32 %v1280, %v1282
        %v1284 = vrot.slane %v1276, %v1283
        %v1286 = vunpack.c.l.s4 1983009808
        %v1287 = vunpack.c.0.s8 %v1286
        %v1288 = vlaneseq
        %v1289 = vshrl.u32 %v1288, 7
        %v1290 = vsub.s32 %v1287, %v1289
        %v1291 = vrot.slane %v1277, %v1290
        %v1292 = vcombine.low %v637, %v701
        %v1293 = vcombine.high %v637, %v701
        %v1295 = vunpack.c.l.s4 1983009808
        %v1296 = vunpack.c.0.s8 %v1295
        %v1297 = vlaneseq
        %v1298 = vshrl.u32 %v1297, 7
        %v1299 = vsub.s32 %v1296, %v1298
        %v1300 = vrot.slane %v1292, %v1299
        %v1302 = vunpack.c.l.s4 1983009808
        %v1303 = vunpack.c.0.s8 %v1302
        %v1304 = vlaneseq
        %v1305 = vshrl.u32 %v1304, 7
        %v1306 = vsub.s32 %v1303, %v1305
        %v1307 = vrot.slane %v1293, %v1306
        %v1308 = vcombine.low %v1252, %v1268
        %v1309 = vcombine.high %v1252, %v1268
        %v1311 = vunpack.c.l.s4 1934713408
        %v1312 = vunpack.c.0.s8 %v1311
        %v1313 = vlaneseq
        %v1314 = vshrl.u32 %v1313, 7
        %v1315 = vsub.s32 %v1312, %v1314
        %v1316 = vrot.slane %v1308, %v1315
        %v1318 = vunpack.c.l.s4 1934713408
        %v1319 = vunpack.c.0.s8 %v1318
        %v1320 = vlaneseq
        %v1321 = vshrl.u32 %v1320, 7
        %v1322 = vsub.s32 %v1319, %v1321
        %v1323 = vrot.slane %v1309, %v1322
        %v1324 = vcombine.low %v1259, %v1275
        %v1325 = vcombine.high %v1259, %v1275
        %v1327 = vunpack.c.l.s4 1934713408
        %v1328 = vunpack.c.0.s8 %v1327
        %v1329 = vlaneseq
        %v1330 = vshrl.u32 %v1329, 7
        %v1331 = vsub.s32 %v1328, %v1330
        %v1332 = vrot.slane %v1324, %v1331
        %v1334 = vunpack.c.l.s4 1934713408
        %v1335 = vunpack.c.0.s8 %v1334
        %v1336 = vlaneseq
        %v1337 = vshrl.u32 %v1336, 7
        %v1338 = vsub.s32 %v1335, %v1337
        %v1339 = vrot.slane %v1325, %v1338
        %v1340 = vcombine.low %v1284, %v1300
        %v1341 = vcombine.high %v1284, %v1300
        %v1343 = vunpack.c.l.s4 1934713408
        %v1344 = vunpack.c.0.s8 %v1343
        %v1345 = vlaneseq
        %v1346 = vshrl.u32 %v1345, 7
        %v1347 = vsub.s32 %v1344, %v1346
        %v1348 = vrot.slane %v1340, %v1347
        %v1350 = vunpack.c.l.s4 1934713408
        %v1351 = vunpack.c.0.s8 %v1350
        %v1352 = vlaneseq
        %v1353 = vshrl.u32 %v1352, 7
        %v1354 = vsub.s32 %v1351, %v1353
        %v1355 = vrot.slane %v1341, %v1354
        %v1356 = vcombine.low %v1291, %v1307
        %v1357 = vcombine.high %v1291, %v1307
        %v1359 = vunpack.c.l.s4 1934713408
        %v1360 = vunpack.c.0.s8 %v1359
        %v1361 = vlaneseq
        %v1362 = vshrl.u32 %v1361, 7
        %v1363 = vsub.s32 %v1360, %v1362
        %v1364 = vrot.slane %v1356, %v1363
        %v1366 = vunpack.c.l.s4 1934713408
        %v1367 = vunpack.c.0.s8 %v1366
        %v1368 = vlaneseq
        %v1369 = vshrl.u32 %v1368, 7
        %v1370 = vsub.s32 %v1367, %v1369
        %v1371 = vrot.slane %v1357, %v1370
        %v1372 = vcombine.low %v1316, %v1348
        %v1373 = vcombine.high %v1316, %v1348
        %v1374 = vcombine.low %v1323, %v1355
        %v1375 = vcombine.high %v1323, %v1355
        %v1376 = vcombine.low %v1332, %v1364
        %v1377 = vcombine.high %v1332, %v1364
        %v1378 = vcombine.low %v1339, %v1371
        %v1379 = vcombine.high %v1339, %v1371
        %v1380 = vcombine.low %v733, %v797
        %v1381 = vcombine.high %v733, %v797
        %v1383 = vunpack.c.l.s4 1983009808
        %v1384 = vunpack.c.0.s8 %v1383
        %v1385 = vlaneseq
        %v1386 = vshrl.u32 %v1385, 7
        %v1387 = vsub.s32 %v1384, %v1386
        %v1388 = vrot.slane %v1380, %v1387
        %v1390 = vunpack.c.l.s4 1983009808
        %v1391 = vunpack.c.0.s8 %v1390
        %v1392 = vlaneseq
        %v1393 = vshrl.u32 %v1392, 7
        %v1394 = vsub.s32 %v1391, %v1393
        %v1395 = vrot.slane %v1381, %v1394
        %v1396 = vcombine.low %v765, %v829
        %v1397 = vcombine.high %v765, %v829
        %v1399 = vunpack.c.l.s4 1983009808
        %v1400 = vunpack.c.0.s8 %v1399
        %v1401 = vlaneseq
        %v1402 = vshrl.u32 %v1401, 7
        %v1403 = vsub.s32 %v1400, %v1402
        %v1404 = vrot.slane %v1396, %v1403
        %v1406 = vunpack.c.l.s4 1983009808
        %v1407 = vunpack.c.0.s8 %v1406
        %v1408 = vlaneseq
        %v1409 = vshrl.u32 %v1408, 7
        %v1410 = vsub.s32 %v1407, %v1409
        %v1411 = vrot.slane %v1397, %v1410
        %v1412 = vcombine.low %v861, %v925
        %v1413 = vcombine.high %v861, %v925
        %v1415 = vunpack.c.l.s4 1983009808
        %v1416 = vunpack.c.0.s8 %v1415
        %v1417 = vlaneseq
        %v1418 = vshrl.u32 %v1417, 7
        %v1419 = vsub.s32 %v1416, %v1418
        %v1420 = vrot.slane %v1412, %v1419
        %v1422 = vunpack.c.l.s4 1983009808
        %v1423 = vunpack.c.0.s8 %v1422
        %v1424 = vlaneseq
        %v1425 = vshrl.u32 %v1424, 7
        %v1426 = vsub.s32 %v1423, %v1425
        %v1427 = vrot.slane %v1413, %v1426
        %v1428 = vcombine.low %v893, %v957
        %v1429 = vcombine.high %v893, %v957
        %v1431 = vunpack.c.l.s4 1983009808
        %v1432 = vunpack.c.0.s8 %v1431
        %v1433 = vlaneseq
        %v1434 = vshrl.u32 %v1433, 7
        %v1435 = vsub.s32 %v1432, %v1434
        %v1436 = vrot.slane %v1428, %v1435
        %v1438 = vunpack.c.l.s4 1983009808
        %v1439 = vunpack.c.0.s8 %v1438
        %v1440 = vlaneseq
        %v1441 = vshrl.u32 %v1440, 7
        %v1442 = vsub.s32 %v1439, %v1441
        %v1443 = vrot.slane %v1429, %v1442
        %v1444 = vcombine.low %v1388, %v1404
        %v1445 = vcombine.high %v1388, %v1404
        %v1447 = vunpack.c.l.s4 1934713408
        %v1448 = vunpack.c.0.s8 %v1447
        %v1449 = vlaneseq
        %v1450 = vshrl.u32 %v1449, 7
        %v1451 = vsub.s32 %v1448, %v1450
        %v1452 = vrot.slane %v1444, %v1451
        %v1454 = vunpack.c.l.s4 1934713408
        %v1455 = vunpack.c.0.s8 %v1454
        %v1456 = vlaneseq
        %v1457 = vshrl.u32 %v1456, 7
        %v1458 = vsub.s32 %v1455, %v1457
        %v1459 = vrot.slane %v1445, %v1458
        %v1460 = vcombine.low %v1395, %v1411
        %v1461 = vcombine.high %v1395, %v1411
        %v1463 = vunpack.c.l.s4 1934713408
        %v1464 = vunpack.c.0.s8 %v1463
        %v1465 = vlaneseq
        %v1466 = vshrl.u32 %v1465, 7
        %v1467 = vsub.s32 %v1464, %v1466
        %v1468 = vrot.slane %v1460, %v1467
        %v1470 = vunpack.c.l.s4 1934713408
        %v1471 = vunpack.c.0.s8 %v1470
        %v1472 = vlaneseq
        %v1473 = vshrl.u32 %v1472, 7
        %v1474 = vsub.s32 %v1471, %v1473
        %v1475 = vrot.slane %v1461, %v1474
        %v1476 = vcombine.low %v1420, %v1436
        %v1477 = vcombine.high %v1420, %v1436
        %v1479 = vunpack.c.l.s4 1934713408
        %v1480 = vunpack.c.0.s8 %v1479
        %v1481 = vlaneseq
        %v1482 = vshrl.u32 %v1481, 7
        %v1483 = vsub.s32 %v1480, %v1482
        %v1484 = vrot.slane %v1476, %v1483
        %v1486 = vunpack.c.l.s4 1934713408
        %v1487 = vunpack.c.0.s8 %v1486
        %v1488 = vlaneseq
        %v1489 = vshrl.u32 %v1488, 7
        %v1490 = vsub.s32 %v1487, %v1489
        %v1491 = vrot.slane %v1477, %v1490
        %v1492 = vcombine.low %v1427, %v1443
        %v1493 = vcombine.high %v1427, %v1443
        %v1495 = vunpack.c.l.s4 1934713408
        %v1496 = vunpack.c.0.s8 %v1495
        %v1497 = vlaneseq
        %v1498 = vshrl.u32 %v1497, 7
        %v1499 = vsub.s32 %v1496, %v1498
        %v1500 = vrot.slane %v1492, %v1499
        %v1502 = vunpack.c.l.s4 1934713408
        %v1503 = vunpack.c.0.s8 %v1502
        %v1504 = vlaneseq
        %v1505 = vshrl.u32 %v1504, 7
        %v1506 = vsub.s32 %v1503, %v1505
        %v1507 = vrot.slane %v1493, %v1506
        %v1508 = vcombine.low %v1452, %v1484
        %v1509 = vcombine.high %v1452, %v1484
        %v1510 = vcombine.low %v1459, %v1491
        %v1511 = vcombine.high %v1459, %v1491
        %v1512 = vcombine.low %v1468, %v1500
        %v1513 = vcombine.high %v1468, %v1500
        %v1514 = vcombine.low %v1475, %v1507
        %v1515 = vcombine.high %v1475, %v1507
        %vm1516 = vcmask 31744
        %1517 = vst.msk [vmem:[%s185] sm:$0xff] %vm1516, %v1100
        %1518 = vst.msk [vmem:[%s185 + $0x8] sm:$0xff] %vm1516, %v1236
        %1519 = vst.msk [vmem:[%s185 + $0x10] sm:$0xff] %vm1516, %v1101
        %1520 = vst.msk [vmem:[%s185 + $0x18] sm:$0xff] %vm1516, %v1237
        %1521 = vst.msk [vmem:[%s185 + $0x20] sm:$0xff] %vm1516, %v1102
        %1522 = vst.msk [vmem:[%s185 + $0x28] sm:$0xff] %vm1516, %v1238
        %1523 = vst.msk [vmem:[%s185 + $0x30] sm:$0xff] %vm1516, %v1103
        %1524 = vst.msk [vmem:[%s185 + $0x38] sm:$0xff] %vm1516, %v1239
        %1525 = vst.msk [vmem:[%s185 + $0x40] sm:$0xff] %vm1516, %v1104
        %1526 = vst.msk [vmem:[%s185 + $0x48] sm:$0xff] %vm1516, %v1240
        %1527 = vst.msk [vmem:[%s185 + $0x50] sm:$0xff] %vm1516, %v1105
        %1528 = vst.msk [vmem:[%s185 + $0x58] sm:$0xff] %vm1516, %v1241
        %1529 = vst.msk [vmem:[%s185 + $0x60] sm:$0xff] %vm1516, %v1106
        %1530 = vst.msk [vmem:[%s185 + $0x68] sm:$0xff] %vm1516, %v1242
        %1531 = vst.msk [vmem:[%s185 + $0x70] sm:$0xff] %vm1516, %v1107
        %1532 = vst.msk [vmem:[%s185 + $0x78] sm:$0xff] %vm1516, %v1243
        %1533 = vst.msk [vmem:[%s185 + $0x80] sm:$0xff] %vm1516, %v1372
        %1534 = vst.msk [vmem:[%s185 + $0x88] sm:$0xff] %vm1516, %v1508
        %1535 = vst.msk [vmem:[%s185 + $0x90] sm:$0xff] %vm1516, %v1373
        %1536 = vst.msk [vmem:[%s185 + $0x98] sm:$0xff] %vm1516, %v1509
        %1537 = vst.msk [vmem:[%s185 + $0xa0] sm:$0xff] %vm1516, %v1374
        %1538 = vst.msk [vmem:[%s185 + $0xa8] sm:$0xff] %vm1516, %v1510
        %1539 = vst.msk [vmem:[%s185 + $0xb0] sm:$0xff] %vm1516, %v1375
        %1540 = vst.msk [vmem:[%s185 + $0xb8] sm:$0xff] %vm1516, %v1511
        %1541 = vst.msk [vmem:[%s185 + $0xc0] sm:$0xff] %vm1516, %v1376
        %1542 = vst.msk [vmem:[%s185 + $0xc8] sm:$0xff] %vm1516, %v1512
        %1543 = vst.msk [vmem:[%s185 + $0xd0] sm:$0xff] %vm1516, %v1377
        %1544 = vst.msk [vmem:[%s185 + $0xd8] sm:$0xff] %vm1516, %v1513
        %1545 = vst.msk [vmem:[%s185 + $0xe0] sm:$0xff] %vm1516, %v1378
        %1546 = vst.msk [vmem:[%s185 + $0xe8] sm:$0xff] %vm1516, %v1514
        %1547 = vst.msk [vmem:[%s185 + $0xf0] sm:$0xff] %vm1516, %v1379
        %1548 = vst.msk [vmem:[%s185 + $0xf8] sm:$0xff] %vm1516, %v1515
        %s1549 = smul.u32 16, %s21
        %s1550 = smul.u32 2, %s22
        %p1551 = scmp.lt.s32.totalorder %s20, 1
        %s1552 = scalar_select %p1551, %s20, 1
        %p1553 = scmp.lt.s32.totalorder %s1549, 15
        %s1554 = scalar_select %p1553, %s1549, 15
        %p1555 = scmp.lt.s32.totalorder %s1550, 1
        %s1556 = scalar_select %p1555, %s1550, 1
        %s1557 = smul.addr %s1554, 2
        %s1558 = sadd.s32 %s1556, %s1557
        %s1559 = smul.addr %s1552, 32
        %s1560 = sadd.s32 %s1558, %s1559
        %s1561 = smul.addr %s1560, 8
        %s1562 = scalar_lea.vmem %s1, %s1561
        // Predicated region
        $region29: #{tpu_custom_call.1} parent=23 // pred_check
          %p1563 = pneg %p86
        $region30: #{tpu_custom_call.1} parent=23 // pred_check_branch
          %1565 = sbr.rel (%p1563) target = $region32
        $region31: #{tpu_custom_call.1} parent=23 // pred_region
          %s1566 = smul.u32 16, %s21
          %s1567 = smul.u32 2, %s22
        $region32: #{tpu_custom_call.1} parent=23 // pred_fallthru
          _
      $region24: #{tpu_custom_call.1} parent=5 // pred_fallthru
        _
      %p1568 = scmp.le.s32.totalorder 2, %s10
      // Predicated region
      $region33: #{tpu_custom_call.1} parent=5 // pred_check
        %p1569 = pneg %p1568
      $region34: #{tpu_custom_call.1} parent=5 // pred_check_branch
        %1571 = sbr.rel (%p1569) target = $region36
      $region35: #{tpu_custom_call.1} parent=5 // pred_region
        %s1572 = ssub.s32 %s10, 2
        // Predicated region
        $region37: #{tpu_custom_call.1} parent=35 // pred_check
          %p1573 = pneg %p92
        $region38: #{tpu_custom_call.1} parent=35 // pred_check_branch
          %1575 = sbr.rel (%p1573) target = $region40
        $region39: #{tpu_custom_call.1} parent=35 // pred_region
          %s1576 = smul.u32 16, %s24
          %s1577 = smul.u32 2, %s25
          %p1578 = scmp.lt.s32.totalorder %s23, 1
          %s1579 = scalar_select %p1578, %s23, 1
          %p1580 = scmp.lt.s32.totalorder %s1576, 15
          %s1581 = scalar_select %p1580, %s1576, 15
          %p1582 = scmp.lt.s32.totalorder %s1577, 1
          %s1583 = scalar_select %p1582, %s1577, 1
          %s1584 = smul.addr %s1581, 2
          %s1585 = sadd.s32 %s1583, %s1584
          %s1586 = smul.addr %s1579, 32
          %s1587 = sadd.s32 %s1585, %s1586
          %s1588 = smul.addr %s1587, 8
          %s1589 = scalar_lea.vmem %s1, %s1588
        $region40: #{tpu_custom_call.1} parent=35 // pred_fallthru
          _
      $region36: #{tpu_custom_call.1} parent=5 // pred_fallthru
        _
    $region6: #{tpu_custom_call.1} parent=1 // loop_footer
      %s14 = sadd.s32 1, %s10
    $region7: #{tpu_custom_call.1} parent=1 // loop_footer_branch
      %9 = sbr.rel target = $region3
    $region8: #{tpu_custom_call.1} parent=1 // loop_exit
      _
    %1590 = vsyncpa [#allocation3], 1
    %s1591 = scalar_lea.sflag [#allocation3], 1
    %1592 = vsyncpa %s1591, 1

</llo_original>
